<compile_context>
chip_gen: v5e
topology: v5e:2x2
jax: 0.10.0
libtpu: 0.0.40
codegen_flags: <defaults>
</compile_context>

<pallas_src>
import functools

import jax
import jax.numpy as jnp
import numpy as np
from jax import lax
from jax.experimental import pallas as pl
from jax.experimental.pallas import tpu as pltpu

_LANE = 128
_NEG = -1e30          # "minus infinity" that stays NaN-free through exp / sub math


def _round_up(x, m):
    return ((x + m - 1) // m) * m


def _dke_kernel(s_tgt_ref, s_ref, t_ref, out_ref,
                m_s, l_s, lT_s, m_t, lT_t, acc_kd, ss_s, ss_t, g_t, g_s,
                *, T, gamma, alpha, beta, n_pad):
    k = pl.program_id(0)
    _, n, _ = s_ref.shape
    B = 2 * n
    invT = 1.0 / T

    # Native-dtype loads (bf16 OK) feed the MXU; f32 copies feed the VPU/EUP path.
    s_nat = s_ref[...]                     # (2, n, tc)
    t_nat = t_ref[...]
    s = s_nat.astype(jnp.float32)
    t = t_nat.astype(jnp.float32)

    @pl.when(k == 0)
    def _init():
        m_s[...] = jnp.full_like(m_s, _NEG)
        m_t[...] = jnp.full_like(m_t, _NEG)
        for r in (l_s, lT_s, lT_t, acc_kd, ss_s, ss_t, g_t, g_s):
            r[...] = jnp.zeros_like(r)

    # ---- online row stats: one shared row-max feeds both the CE (T=1) and the
    #      tempered (T) logsumexp accumulators.  No per-lane padding masks here;
    #      the exact pad contribution is removed once at finalize. --------------
    m_s_old = m_s[...]
    m_s_new = jnp.maximum(m_s_old, jnp.max(s, axis=2, keepdims=True))
    l_s[...] = (jnp.exp(m_s_old - m_s_new) * l_s[...]
                + jnp.sum(jnp.exp(s - m_s_new), axis=2, keepdims=True))
    lT_s[...] = (jnp.exp((m_s_old - m_s_new) * invT) * lT_s[...]
                 + jnp.sum(jnp.exp((s - m_s_new) * invT), axis=2, keepdims=True))
    m_s[...] = m_s_new

    m_t_old = m_t[...]
    m_t_new = jnp.maximum(m_t_old, jnp.max(t, axis=2, keepdims=True))
    rT = jnp.exp((m_t_old - m_t_new) * invT)
    p = jnp.exp((t - m_t_new) * invT)      # unnormalized tempered teacher probs
    lT_t[...] = rT * lT_t[...] + jnp.sum(p, axis=2, keepdims=True)
    # padded lanes: t == s == 0 there, so (t - s) == 0 -> exact 0 contribution
    acc_kd[...] = rT * acc_kd[...] + jnp.sum(p * ((t - s) * invT),
                                             axis=2, keepdims=True)
    m_t[...] = m_t_new

    # ---- raw (un-normalized) similarity accumulators (zero pads are exact) ----
    ss_s[...] += jnp.sum(s * s, axis=2, keepdims=True)
    ss_t[...] += jnp.sum(t * t, axis=2, keepdims=True)
    dn = (((1,), (1,)), ((), ()))          # contract the class axis
    g_t[...] += lax.dot_general(t_nat[0], t_nat[1], dn,
                                preferred_element_type=jnp.float32)
    g_s[...] += lax.dot_general(s_nat[0], s_nat[1], dn,
                                preferred_element_type=jnp.float32)

    # ---- finalize on the last class tile --------------------------------------
    @pl.when(k == pl.num_programs(0) - 1)
    def _finalize():
        # Remove the zero-padded lane contribution from the softmax sums.
        # NOTE: assumes real logits are not so negative that exp(s - m) fully
        # underflows when m is pinned at 0 by the pads (true for normal logits).
        if n_pad:
            l_s_f = l_s[...] - n_pad * jnp.exp(-m_s[...])
            lT_s_f = lT_s[...] - n_pad * jnp.exp(-m_s[...] * invT)
            lT_t_f = lT_t[...] - n_pad * jnp.exp(-m_t[...] * invT)
        else:
            l_s_f, lT_s_f, lT_t_f = l_s[...], lT_s[...], lT_t[...]

        # cross entropy: mean_b [ logsumexp(s_b) - s_b[target_b] ]
        lse_s = m_s[...] + jnp.log(l_s_f)                      # (2, n, 1)
        loss_cls = jnp.sum(lse_s - s_tgt_ref[...]) * (1.0 / B)

        # tempered KL * T^2 : sum_c pt*(log_pt - log_ps)
        lseT_s = m_s[...] * invT + jnp.log(lT_s_f)
        lseT_t = m_t[...] * invT + jnp.log(lT_t_f)
        kd = (acc_kd[...] / lT_t_f + (lseT_s - lseT_t)) * (T * T)
        loss_kd = jnp.sum(kd) * (1.0 / B)

        def norm_sim(g, ss):
            # 1/max(||row||,1e-12) == rsqrt(max(||row||^2,1e-24)) -> EUP
            inv1 = lax.rsqrt(jnp.maximum(ss[0], 1e-24))        # (n, 1)
            inv2 = lax.rsqrt(jnp.maximum(ss[1], 1e-24))        # (n, 1)
            # inv1 @ inv2^T outer product -> row & column scale; no diag matmul
            scale = lax.dot_general(inv1, inv2, (((1,), (1,)), ((), ())),
                                    preferred_element_type=jnp.float32)
            sim = g * scale
            # rows are L2-normalized, so ||an||^2 = ||bn||^2 = 1 (only rows with
            # norm < 1e-12 differ) => dist^2 = 2 - 2*sim.
            dist = jnp.sqrt(jnp.maximum(2.0 - 2.0 * sim, 0.0) + 1e-8)
            return sim, dist

        t_sim, t_dist = norm_sim(g_t[...], ss_t[...])
        s_sim, s_dist = norm_sim(g_s[...], ss_s[...])

        def weight(x):                     # softmax over flattened matrix * n^2
            z = x * invT + 1e-8
            zmax = jnp.max(jnp.max(z, axis=1, keepdims=True), axis=0, keepdims=True)
            e = jnp.exp(z - zmax)
            esum = jnp.sum(jnp.sum(e, axis=1, keepdims=True), axis=0, keepdims=True)
            return e * (float(n * n) / esum)

        rel = (weight(-t_sim) * (s_sim - t_sim) ** 2
               + weight(t_dist) * (s_dist - t_dist) ** 2)
        relationship_loss = jnp.sum(rel) * (1.0 / (n * n))

        out_ref[0] = gamma * loss_cls + alpha * loss_kd + beta * relationship_loss


def dke_loss(logit_s, logit_t, targets, *, T, gamma, alpha, beta, max_block_c=None):
    """DKE forward (None-aux branch).  logits: (B, C); targets: (B,) int."""
    B, C = logit_s.shape
    if B % 2 != 0:
        raise ValueError("DKE requires an even batch size (it pairs the two halves).")
    assert logit_t.shape == (B, C)
    n = B // 2
    itemsize = jnp.dtype(logit_s.dtype).itemsize

    # ---- class-tile selection under a per-generation VMEM budget --------------
    try:
        vmem_cap = int(getattr(pltpu.get_tpu_info(), "vmem_capacity_bytes", 64 << 20))
    except Exception:
        vmem_cap = 64 << 20                        # conservative (v7x) default
    vmem_limit = (min(vmem_cap, 128 << 20) * 3) // 4   # 48 MiB v7x / 96 MiB v5e,v6e
    budget = (vmem_limit * 4) // 5                     # headroom for pipeline misc
    fixed = 2 * n * n * 4 + 12 * B * 4                 # g_s/g_t + row stats + s_tgt
    per_col = 2 * 2 * B * itemsize                     # 2 logits x double-buffered
    tc_budget = (max(budget - fixed, 0) // per_col) // _LANE * _LANE
    tc = min(max(tc_budget, _LANE), _round_up(C, _LANE))
    if max_block_c is not None:
        tc = min(tc, max(_round_up(max_block_c, _LANE), _LANE))
    c_pad = _round_up(C, tc)
    n_pad = c_pad - C
    num_tiles = c_pad // tc

    # target logit gathered outside the hot loop (B elements, negligible)
    s_tgt = jnp.take_along_axis(logit_s, targets.astype(jnp.int32)[:, None], axis=1)
    s_tgt = s_tgt.astype(jnp.float32).reshape(2, n, 1)

    if n_pad:                                       # zero-pad; corrected at finalize
        logit_s = jnp.pad(logit_s, ((0, 0), (0, n_pad)))
        logit_t = jnp.pad(logit_t, ((0, 0), (0, n_pad)))
    # aligned half-batch layout: (2, n, C) so halves are whole leading-axis blocks
    logit_s = logit_s.reshape(2, n, c_pad)
    logit_t = logit_t.reshape(2, n, c_pad)

    kernel = functools.partial(
        _dke_kernel, T=float(T), gamma=float(gamma), alpha=float(alpha),
        beta=float(beta), n_pad=int(n_pad))

    row_stat = lambda: pltpu.VMEM((2, n, 1), jnp.float32)
    out = pl.pallas_call(
        kernel,
        out_shape=jax.ShapeDtypeStruct((1,), jnp.float32),
        grid_spec=pltpu.PrefetchScalarGridSpec(
            num_scalar_prefetch=0,
            grid=(num_tiles,),
            in_specs=[
                pl.BlockSpec((2, n, 1), lambda k: (0, 0, 0)),   # s[b, target_b]
                pl.BlockSpec((2, n, tc), lambda k: (0, 0, k)),  # student logits tile
                pl.BlockSpec((2, n, tc), lambda k: (0, 0, k)),  # teacher logits tile
            ],
            out_specs=pl.BlockSpec(memory_space=pltpu.MemorySpace.SMEM),
            scratch_shapes=[
                row_stat(),                       # m_s    running max of s rows
                row_stat(),                       # l_s    sum exp(s - m_s)
                row_stat(),                       # lT_s   sum exp((s - m_s)/T)
                row_stat(),                       # m_t    running max of t rows
                row_stat(),                       # lT_t   sum exp((t - m_t)/T)
                row_stat(),                       # acc_kd
                row_stat(),                       # ss_s   row sum of squares
                row_stat(),                       # ss_t
                pltpu.VMEM((n, n), jnp.float32),  # g_t    t[:n] @ t[n:].T
                pltpu.VMEM((n, n), jnp.float32),  # g_s    s[:n] @ s[n:].T
            ],
        ),
        compiler_params=pltpu.CompilerParams(
            dimension_semantics=("arbitrary",),
            vmem_limit_bytes=int(vmem_limit)),
    )(s_tgt, logit_s, logit_t)
    return out[0]


def _ref_loss(logit_s, logit_t, targets, T, gamma, alpha, beta):
    """Plain-JAX mirror of the PyTorch forward (None-aux branch)."""
    log_probs = jax.nn.log_softmax(logit_s, axis=1)
    ce = -jnp.take_along_axis(log_probs, targets[:, None], axis=1)[:, 0]
    loss_cls = ce.mean()

    log_ps = jax.nn.log_softmax(logit_s / T, axis=1)
    log_pt = jax.nn.log_softmax(logit_t / T, axis=1)
    pt = jnp.exp(log_pt)
    loss_kd = ((pt * (log_pt - log_ps)).sum(1) * T * T).mean()

    n = logit_s.shape[0] // 2

    def sim_dist(a, b):
        an = a / jnp.maximum(jnp.linalg.norm(a, axis=1, keepdims=True), 1e-12)
        bn = b / jnp.maximum(jnp.linalg.norm(b, axis=1, keepdims=True), 1e-12)
        sim = an @ bn.T
        dist = jnp.sqrt(jnp.sum((an[:, None, :] - bn[None, :, :]) ** 2, axis=2) + 1e-8)
        return sim, dist

    t_sim, t_dist = sim_dist(logit_t[:n], logit_t[n:])
    s_sim, s_dist = sim_dist(logit_s[:n], logit_s[n:])

    def weighting(x):
        v = x.reshape(-1)
        return (jax.nn.softmax(v / T + 1e-8) * v.size).reshape(x.shape)

    rel = weighting(-t_sim) * (s_sim - t_sim) ** 2 + weighting(t_dist) * (s_dist - t_dist) ** 2
    return gamma * loss_cls + alpha * loss_kd + beta * rel.mean()


if __name__ == "__main__":
    T, gamma, alpha, beta = 4.0, 1.0, 0.9, 0.1   # DKE hyperparameters (multiple unused here)
    key = jax.random.PRNGKey(0)

    # (B, C, max_block_c): single padded tile / multi-tile no-pad / multi-tile + pad
    cases = [(8, 32, None), (8, 384, 128), (8, 200, 128)]
    for (B, C, blk) in cases:
        k1, k2, k3, key = jax.random.split(key, 4)
        logit_s = jax.random.normal(k1, (B, C), dtype=jnp.float32)
        logit_t = jax.random.normal(k2, (B, C), dtype=jnp.float32)
        targets = jax.random.randint(k3, (B,), 0, C)

        out = dke_loss(logit_s, logit_t, targets, T=T, gamma=gamma,
                       alpha=alpha, beta=beta, max_block_c=blk)
        out = jax.block_until_ready(out)

        ref = _ref_loss(logit_s, logit_t, targets, T, gamma, alpha, beta)
        np.testing.assert_allclose(float(out), float(ref), rtol=5e-3, atol=1e-3)

    # bf16 inputs: native bf16 tiles go straight to the MXU (f32 accumulation)
    k1, k2, k3, key = jax.random.split(key, 4)
    B, C = 8, 512
    logit_s = jax.random.normal(k1, (B, C), dtype=jnp.float32).astype(jnp.bfloat16)
    logit_t = jax.random.normal(k2, (B, C), dtype=jnp.float32).astype(jnp.bfloat16)
    targets = jax.random.randint(k3, (B,), 0, C)
    out = jax.block_until_ready(
        dke_loss(logit_s, logit_t, targets, T=T, gamma=gamma, alpha=alpha, beta=beta))
    ref = _ref_loss(logit_s.astype(jnp.float32), logit_t.astype(jnp.float32),
                    targets, T, gamma, alpha, beta)
    np.testing.assert_allclose(float(out), float(ref), rtol=2e-2, atol=2e-2)

    print("KERNEL_OK")
</pallas_src>

<mosaic_0001>
module attributes {stable_mosaic.version = 11 : i64} {
  func.func @_dke_kernel(%arg0: i32, %arg1: memref<2x4x1xf32, #tpu.memory_space<vmem>>, %arg2: memref<2x4x128xf32, #tpu.memory_space<vmem>>, %arg3: memref<2x4x128xf32, #tpu.memory_space<vmem>>, %arg4: memref<1xf32, #tpu.memory_space<smem>>, %arg5: memref<2x4x1xf32, #tpu.memory_space<vmem>>, %arg6: memref<2x4x1xf32, #tpu.memory_space<vmem>>, %arg7: memref<2x4x1xf32, #tpu.memory_space<vmem>>, %arg8: memref<2x4x1xf32, #tpu.memory_space<vmem>>, %arg9: memref<2x4x1xf32, #tpu.memory_space<vmem>>, %arg10: memref<2x4x1xf32, #tpu.memory_space<vmem>>, %arg11: memref<2x4x1xf32, #tpu.memory_space<vmem>>, %arg12: memref<2x4x1xf32, #tpu.memory_space<vmem>>, %arg13: memref<4x4xf32, #tpu.memory_space<vmem>>, %arg14: memref<4x4xf32, #tpu.memory_space<vmem>>) attributes {dimension_semantics = [#tpu.dimension_semantics<arbitrary>], iteration_bounds = array<i64: 1>, scalar_prefetch = 0 : i64, scratch_operands = 10 : i64, tpu.core_type = #tpu.core_type<tc>, window_params = [{pipeline_mode = #tpu.pipeline_mode<synchronous>, transform_indices = @transform_0, window_bounds = array<i64: 2, 4, 1>}, {transform_indices = @transform_1, window_bounds = array<i64: 2, 4, 128>}, {transform_indices = @transform_2, window_bounds = array<i64: 2, 4, 128>}, {transform_indices = @transform_3, window_bounds = array<i64: 1>}]} {
    %c0 = arith.constant 0 : index
    %c0_0 = arith.constant 0 : index
    %c0_1 = arith.constant 0 : index
    %0 = vector.load %arg2[%c0, %c0_0, %c0_1] : memref<2x4x128xf32, #tpu.memory_space<vmem>>, vector<2x4x128xf32>
    %c0_2 = arith.constant 0 : index
    %c0_3 = arith.constant 0 : index
    %c0_4 = arith.constant 0 : index
    %1 = vector.load %arg3[%c0_2, %c0_3, %c0_4] : memref<2x4x128xf32, #tpu.memory_space<vmem>>, vector<2x4x128xf32>
    %c0_i32 = arith.constant 0 : i32
    %2 = arith.cmpi eq, %arg0, %c0_i32 : i32
    %3 = arith.extui %2 : i1 to i32
    %c0_i32_5 = arith.constant 0 : i32
    %4 = arith.cmpi ne, %3, %c0_i32_5 : i32
    scf.if %4 {
      %cst_78 = arith.constant -1.000000e+30 : f32
      %97 = vector.broadcast %cst_78 : f32 to vector<2x4x1xf32>
      %c0_79 = arith.constant 0 : index
      %c0_80 = arith.constant 0 : index
      %c0_81 = arith.constant 0 : index
      %98 = vector.load %arg5[%c0_79, %c0_80, %c0_81] : memref<2x4x1xf32, #tpu.memory_space<vmem>>, vector<2x4x1xf32>
      tpu.vector_store %arg5[%c0_79, %c0_80, %c0_81], %97 {strides = array<i32>} : memref<2x4x1xf32, #tpu.memory_space<vmem>>, vector<2x4x1xf32>,
      %cst_82 = arith.constant -1.000000e+30 : f32
      %99 = vector.broadcast %cst_82 : f32 to vector<2x4x1xf32>
      %c0_83 = arith.constant 0 : index
      %c0_84 = arith.constant 0 : index
      %c0_85 = arith.constant 0 : index
      %100 = vector.load %arg8[%c0_83, %c0_84, %c0_85] : memref<2x4x1xf32, #tpu.memory_space<vmem>>, vector<2x4x1xf32>
      tpu.vector_store %arg8[%c0_83, %c0_84, %c0_85], %99 {strides = array<i32>} : memref<2x4x1xf32, #tpu.memory_space<vmem>>, vector<2x4x1xf32>,
      %cst_86 = arith.constant 0.000000e+00 : f32
      %101 = vector.broadcast %cst_86 : f32 to vector<2x4x1xf32>
      %c0_87 = arith.constant 0 : index
      %c0_88 = arith.constant 0 : index
      %c0_89 = arith.constant 0 : index
      %102 = vector.load %arg6[%c0_87, %c0_88, %c0_89] : memref<2x4x1xf32, #tpu.memory_space<vmem>>, vector<2x4x1xf32>
      tpu.vector_store %arg6[%c0_87, %c0_88, %c0_89], %101 {strides = array<i32>} : memref<2x4x1xf32, #tpu.memory_space<vmem>>, vector<2x4x1xf32>,
      %cst_90 = arith.constant 0.000000e+00 : f32
      %103 = vector.broadcast %cst_90 : f32 to vector<2x4x1xf32>
      %c0_91 = arith.constant 0 : index
      %c0_92 = arith.constant 0 : index
      %c0_93 = arith.constant 0 : index
      %104 = vector.load %arg7[%c0_91, %c0_92, %c0_93] : memref<2x4x1xf32, #tpu.memory_space<vmem>>, vector<2x4x1xf32>
      tpu.vector_store %arg7[%c0_91, %c0_92, %c0_93], %103 {strides = array<i32>} : memref<2x4x1xf32, #tpu.memory_space<vmem>>, vector<2x4x1xf32>,
      %cst_94 = arith.constant 0.000000e+00 : f32
      %105 = vector.broadcast %cst_94 : f32 to vector<2x4x1xf32>
      %c0_95 = arith.constant 0 : index
      %c0_96 = arith.constant 0 : index
      %c0_97 = arith.constant 0 : index
      %106 = vector.load %arg9[%c0_95, %c0_96, %c0_97] : memref<2x4x1xf32, #tpu.memory_space<vmem>>, vector<2x4x1xf32>
      tpu.vector_store %arg9[%c0_95, %c0_96, %c0_97], %105 {strides = array<i32>} : memref<2x4x1xf32, #tpu.memory_space<vmem>>, vector<2x4x1xf32>,
      %cst_98 = arith.constant 0.000000e+00 : f32
      %107 = vector.broadcast %cst_98 : f32 to vector<2x4x1xf32>
      %c0_99 = arith.constant 0 : index
      %c0_100 = arith.constant 0 : index
      %c0_101 = arith.constant 0 : index
      %108 = vector.load %arg10[%c0_99, %c0_100, %c0_101] : memref<2x4x1xf32, #tpu.memory_space<vmem>>, vector<2x4x1xf32>
      tpu.vector_store %arg10[%c0_99, %c0_100, %c0_101], %107 {strides = array<i32>} : memref<2x4x1xf32, #tpu.memory_space<vmem>>, vector<2x4x1xf32>,
      %cst_102 = arith.constant 0.000000e+00 : f32
      %109 = vector.broadcast %cst_102 : f32 to vector<2x4x1xf32>
      %c0_103 = arith.constant 0 : index
      %c0_104 = arith.constant 0 : index
      %c0_105 = arith.constant 0 : index
      %110 = vector.load %arg11[%c0_103, %c0_104, %c0_105] : memref<2x4x1xf32, #tpu.memory_space<vmem>>, vector<2x4x1xf32>
      tpu.vector_store %arg11[%c0_103, %c0_104, %c0_105], %109 {strides = array<i32>} : memref<2x4x1xf32, #tpu.memory_space<vmem>>, vector<2x4x1xf32>,
      %cst_106 = arith.constant 0.000000e+00 : f32
      %111 = vector.broadcast %cst_106 : f32 to vector<2x4x1xf32>
      %c0_107 = arith.constant 0 : index
      %c0_108 = arith.constant 0 : index
      %c0_109 = arith.constant 0 : index
      %112 = vector.load %arg12[%c0_107, %c0_108, %c0_109] : memref<2x4x1xf32, #tpu.memory_space<vmem>>, vector<2x4x1xf32>
      tpu.vector_store %arg12[%c0_107, %c0_108, %c0_109], %111 {strides = array<i32>} : memref<2x4x1xf32, #tpu.memory_space<vmem>>, vector<2x4x1xf32>,
      %cst_110 = arith.constant 0.000000e+00 : f32
      %113 = vector.broadcast %cst_110 : f32 to vector<4x4xf32>
      %c0_111 = arith.constant 0 : index
      %c0_112 = arith.constant 0 : index
      %114 = vector.load %arg13[%c0_111, %c0_112] : memref<4x4xf32, #tpu.memory_space<vmem>>, vector<4x4xf32>
      tpu.vector_store %arg13[%c0_111, %c0_112], %113 {strides = array<i32>} : memref<4x4xf32, #tpu.memory_space<vmem>>, vector<4x4xf32>,
      %cst_113 = arith.constant 0.000000e+00 : f32
      %115 = vector.broadcast %cst_113 : f32 to vector<4x4xf32>
      %c0_114 = arith.constant 0 : index
      %c0_115 = arith.constant 0 : index
      %116 = vector.load %arg14[%c0_114, %c0_115] : memref<4x4xf32, #tpu.memory_space<vmem>>, vector<4x4xf32>
      tpu.vector_store %arg14[%c0_114, %c0_115], %115 {strides = array<i32>} : memref<4x4xf32, #tpu.memory_space<vmem>>, vector<4x4xf32>,
    } else {
    }
    %c0_6 = arith.constant 0 : index
    %c0_7 = arith.constant 0 : index
    %c0_8 = arith.constant 0 : index
    %5 = vector.load %arg5[%c0_6, %c0_7, %c0_8] : memref<2x4x1xf32, #tpu.memory_space<vmem>>, vector<2x4x1xf32>
    %cst = arith.constant dense<0xFF800000> : vector<2x4xf32>
    %6 = vector.multi_reduction <maximumf>, %0, %cst [2] : vector<2x4x128xf32> to vector<2x4xf32>
    %7 = vector.shape_cast %6 : vector<2x4xf32> to vector<2x4x1xf32>
    %8 = arith.maximumf %5, %7 : vector<2x4x1xf32>
    %9 = arith.subf %5, %8 : vector<2x4x1xf32>
    %10 = math.exp %9 : vector<2x4x1xf32>
    %c0_9 = arith.constant 0 : index
    %c0_10 = arith.constant 0 : index
    %c0_11 = arith.constant 0 : index
    %11 = vector.load %arg6[%c0_9, %c0_10, %c0_11] : memref<2x4x1xf32, #tpu.memory_space<vmem>>, vector<2x4x1xf32>
    %12 = arith.mulf %10, %11 : vector<2x4x1xf32>
    %13 = vector.broadcast %8 : vector<2x4x1xf32> to vector<2x4x128xf32>
    %14 = arith.subf %0, %13 : vector<2x4x128xf32>
    %15 = math.exp %14 : vector<2x4x128xf32>
    %cst_12 = arith.constant dense<0.000000e+00> : vector<2x4xf32>
    %16 = vector.multi_reduction <add>, %15, %cst_12 [2] : vector<2x4x128xf32> to vector<2x4xf32>
    %17 = vector.shape_cast %16 : vector<2x4xf32> to vector<2x4x1xf32>
    %18 = arith.addf %12, %17 : vector<2x4x1xf32>
    %c0_13 = arith.constant 0 : index
    %c0_14 = arith.constant 0 : index
    %c0_15 = arith.constant 0 : index
    %19 = vector.load %arg6[%c0_13, %c0_14, %c0_15] : memref<2x4x1xf32, #tpu.memory_space<vmem>>, vector<2x4x1xf32>
    tpu.vector_store %arg6[%c0_13, %c0_14, %c0_15], %18 {strides = array<i32>} : memref<2x4x1xf32, #tpu.memory_space<vmem>>, vector<2x4x1xf32>,
    %20 = arith.subf %5, %8 : vector<2x4x1xf32>
    %cst_16 = arith.constant 2.500000e-01 : f32
    %21 = vector.broadcast %cst_16 : f32 to vector<2x4x1xf32>
    %22 = arith.mulf %20, %21 : vector<2x4x1xf32>
    %23 = math.exp %22 : vector<2x4x1xf32>
    %c0_17 = arith.constant 0 : index
    %c0_18 = arith.constant 0 : index
    %c0_19 = arith.constant 0 : index
    %24 = vector.load %arg7[%c0_17, %c0_18, %c0_19] : memref<2x4x1xf32, #tpu.memory_space<vmem>>, vector<2x4x1xf32>
    %25 = arith.mulf %23, %24 : vector<2x4x1xf32>
    %26 = vector.broadcast %8 : vector<2x4x1xf32> to vector<2x4x128xf32>
    %27 = arith.subf %0, %26 : vector<2x4x128xf32>
    %cst_20 = arith.constant 2.500000e-01 : f32
    %28 = vector.broadcast %cst_20 : f32 to vector<2x4x128xf32>
    %29 = arith.mulf %27, %28 : vector<2x4x128xf32>
    %30 = math.exp %29 : vector<2x4x128xf32>
    %cst_21 = arith.constant dense<0.000000e+00> : vector<2x4xf32>
    %31 = vector.multi_reduction <add>, %30, %cst_21 [2] : vector<2x4x128xf32> to vector<2x4xf32>
    %32 = vector.shape_cast %31 : vector<2x4xf32> to vector<2x4x1xf32>
    %33 = arith.addf %25, %32 : vector<2x4x1xf32>
    %c0_22 = arith.constant 0 : index
    %c0_23 = arith.constant 0 : index
    %c0_24 = arith.constant 0 : index
    %34 = vector.load %arg7[%c0_22, %c0_23, %c0_24] : memref<2x4x1xf32, #tpu.memory_space<vmem>>, vector<2x4x1xf32>
    tpu.vector_store %arg7[%c0_22, %c0_23, %c0_24], %33 {strides = array<i32>} : memref<2x4x1xf32, #tpu.memory_space<vmem>>, vector<2x4x1xf32>,
    %c0_25 = arith.constant 0 : index
    %c0_26 = arith.constant 0 : index
    %c0_27 = arith.constant 0 : index
    %35 = vector.load %arg5[%c0_25, %c0_26, %c0_27] : memref<2x4x1xf32, #tpu.memory_space<vmem>>, vector<2x4x1xf32>
    tpu.vector_store %arg5[%c0_25, %c0_26, %c0_27], %8 {strides = array<i32>} : memref<2x4x1xf32, #tpu.memory_space<vmem>>, vector<2x4x1xf32>,
    %c0_28 = arith.constant 0 : index
    %c0_29 = arith.constant 0 : index
    %c0_30 = arith.constant 0 : index
    %36 = vector.load %arg8[%c0_28, %c0_29, %c0_30] : memref<2x4x1xf32, #tpu.memory_space<vmem>>, vector<2x4x1xf32>
    %cst_31 = arith.constant dense<0xFF800000> : vector<2x4xf32>
    %37 = vector.multi_reduction <maximumf>, %1, %cst_31 [2] : vector<2x4x128xf32> to vector<2x4xf32>
    %38 = vector.shape_cast %37 : vector<2x4xf32> to vector<2x4x1xf32>
    %39 = arith.maximumf %36, %38 : vector<2x4x1xf32>
    %40 = arith.subf %36, %39 : vector<2x4x1xf32>
    %cst_32 = arith.constant 2.500000e-01 : f32
    %41 = vector.broadcast %cst_32 : f32 to vector<2x4x1xf32>
    %42 = arith.mulf %40, %41 : vector<2x4x1xf32>
    %43 = math.exp %42 : vector<2x4x1xf32>
    %44 = vector.broadcast %39 : vector<2x4x1xf32> to vector<2x4x128xf32>
    %45 = arith.subf %1, %44 : vector<2x4x128xf32>
    %cst_33 = arith.constant 2.500000e-01 : f32
    %46 = vector.broadcast %cst_33 : f32 to vector<2x4x128xf32>
    %47 = arith.mulf %45, %46 : vector<2x4x128xf32>
    %48 = math.exp %47 : vector<2x4x128xf32>
    %c0_34 = arith.constant 0 : index
    %c0_35 = arith.constant 0 : index
    %c0_36 = arith.constant 0 : index
    %49 = vector.load %arg9[%c0_34, %c0_35, %c0_36] : memref<2x4x1xf32, #tpu.memory_space<vmem>>, vector<2x4x1xf32>
    %50 = arith.mulf %43, %49 : vector<2x4x1xf32>
    %cst_37 = arith.constant dense<0.000000e+00> : vector<2x4xf32>
    %51 = vector.multi_reduction <add>, %48, %cst_37 [2] : vector<2x4x128xf32> to vector<2x4xf32>
    %52 = vector.shape_cast %51 : vector<2x4xf32> to vector<2x4x1xf32>
    %53 = arith.addf %50, %52 : vector<2x4x1xf32>
    %c0_38 = arith.constant 0 : index
    %c0_39 = arith.constant 0 : index
    %c0_40 = arith.constant 0 : index
    %54 = vector.load %arg9[%c0_38, %c0_39, %c0_40] : memref<2x4x1xf32, #tpu.memory_space<vmem>>, vector<2x4x1xf32>
    tpu.vector_store %arg9[%c0_38, %c0_39, %c0_40], %53 {strides = array<i32>} : memref<2x4x1xf32, #tpu.memory_space<vmem>>, vector<2x4x1xf32>,
    %c0_41 = arith.constant 0 : index
    %c0_42 = arith.constant 0 : index
    %c0_43 = arith.constant 0 : index
    %55 = vector.load %arg10[%c0_41, %c0_42, %c0_43] : memref<2x4x1xf32, #tpu.memory_space<vmem>>, vector<2x4x1xf32>
    %56 = arith.mulf %43, %55 : vector<2x4x1xf32>
    %57 = arith.subf %1, %0 : vector<2x4x128xf32>
    %cst_44 = arith.constant 2.500000e-01 : f32
    %58 = vector.broadcast %cst_44 : f32 to vector<2x4x128xf32>
    %59 = arith.mulf %57, %58 : vector<2x4x128xf32>
    %60 = arith.mulf %48, %59 : vector<2x4x128xf32>
    %cst_45 = arith.constant dense<0.000000e+00> : vector<2x4xf32>
    %61 = vector.multi_reduction <add>, %60, %cst_45 [2] : vector<2x4x128xf32> to vector<2x4xf32>
    %62 = vector.shape_cast %61 : vector<2x4xf32> to vector<2x4x1xf32>
    %63 = arith.addf %56, %62 : vector<2x4x1xf32>
    %c0_46 = arith.constant 0 : index
    %c0_47 = arith.constant 0 : index
    %c0_48 = arith.constant 0 : index
    %64 = vector.load %arg10[%c0_46, %c0_47, %c0_48] : memref<2x4x1xf32, #tpu.memory_space<vmem>>, vector<2x4x1xf32>
    tpu.vector_store %arg10[%c0_46, %c0_47, %c0_48], %63 {strides = array<i32>} : memref<2x4x1xf32, #tpu.memory_space<vmem>>, vector<2x4x1xf32>,
    %c0_49 = arith.constant 0 : index
    %c0_50 = arith.constant 0 : index
    %c0_51 = arith.constant 0 : index
    %65 = vector.load %arg8[%c0_49, %c0_50, %c0_51] : memref<2x4x1xf32, #tpu.memory_space<vmem>>, vector<2x4x1xf32>
    tpu.vector_store %arg8[%c0_49, %c0_50, %c0_51], %39 {strides = array<i32>} : memref<2x4x1xf32, #tpu.memory_space<vmem>>, vector<2x4x1xf32>,
    %c0_52 = arith.constant 0 : index
    %c0_53 = arith.constant 0 : index
    %c0_54 = arith.constant 0 : index
    %66 = vector.load %arg11[%c0_52, %c0_53, %c0_54] : memref<2x4x1xf32, #tpu.memory_space<vmem>>, vector<2x4x1xf32>
    %67 = arith.mulf %0, %0 : vector<2x4x128xf32>
    %cst_55 = arith.constant dense<0.000000e+00> : vector<2x4xf32>
    %68 = vector.multi_reduction <add>, %67, %cst_55 [2] : vector<2x4x128xf32> to vector<2x4xf32>
    %69 = vector.shape_cast %68 : vector<2x4xf32> to vector<2x4x1xf32>
    %70 = arith.addf %66, %69 : vector<2x4x1xf32>
    %c0_56 = arith.constant 0 : index
    %c0_57 = arith.constant 0 : index
    %c0_58 = arith.constant 0 : index
    %71 = vector.load %arg11[%c0_56, %c0_57, %c0_58] : memref<2x4x1xf32, #tpu.memory_space<vmem>>, vector<2x4x1xf32>
    tpu.vector_store %arg11[%c0_56, %c0_57, %c0_58], %70 {strides = array<i32>} : memref<2x4x1xf32, #tpu.memory_space<vmem>>, vector<2x4x1xf32>,
    %c0_59 = arith.constant 0 : index
    %c0_60 = arith.constant 0 : index
    %c0_61 = arith.constant 0 : index
    %72 = vector.load %arg12[%c0_59, %c0_60, %c0_61] : memref<2x4x1xf32, #tpu.memory_space<vmem>>, vector<2x4x1xf32>
    %73 = arith.mulf %1, %1 : vector<2x4x128xf32>
    %cst_62 = arith.constant dense<0.000000e+00> : vector<2x4xf32>
    %74 = vector.multi_reduction <add>, %73, %cst_62 [2] : vector<2x4x128xf32> to vector<2x4xf32>
    %75 = vector.shape_cast %74 : vector<2x4xf32> to vector<2x4x1xf32>
    %76 = arith.addf %72, %75 : vector<2x4x1xf32>
    %c0_63 = arith.constant 0 : index
    %c0_64 = arith.constant 0 : index
    %c0_65 = arith.constant 0 : index
    %77 = vector.load %arg12[%c0_63, %c0_64, %c0_65] : memref<2x4x1xf32, #tpu.memory_space<vmem>>, vector<2x4x1xf32>
    tpu.vector_store %arg12[%c0_63, %c0_64, %c0_65], %76 {strides = array<i32>} : memref<2x4x1xf32, #tpu.memory_space<vmem>>, vector<2x4x1xf32>,
    %c0_66 = arith.constant 0 : index
    %c0_67 = arith.constant 0 : index
    %78 = vector.load %arg13[%c0_66, %c0_67] : memref<4x4xf32, #tpu.memory_space<vmem>>, vector<4x4xf32>
    %79 = vector.extract_strided_slice %1 {offsets = [0, 0, 0], sizes = [1, 4, 128], strides = [1, 1, 1]} : vector<2x4x128xf32> to vector<1x4x128xf32>
    %80 = vector.shape_cast %79 : vector<1x4x128xf32> to vector<4x128xf32>
    %81 = vector.extract_strided_slice %1 {offsets = [1, 0, 0], sizes = [1, 4, 128], strides = [1, 1, 1]} : vector<2x4x128xf32> to vector<1x4x128xf32>
    %82 = vector.shape_cast %81 : vector<1x4x128xf32> to vector<4x128xf32>
    %cst_68 = arith.constant dense<0.000000e+00> : vector<4x4xf32>
    %83 = tpu.matmul %80, %82, %cst_68 {dimension_numbers = #tpu.dot_dimension_numbers<[1], [1], [0], [0], [0, 0, 1, 0], [], []>} : vector<4x128xf32>, vector<4x128xf32>, vector<4x4xf32> -> vector<4x4xf32>
    %84 = arith.addf %78, %83 : vector<4x4xf32>
    %c0_69 = arith.constant 0 : index
    %c0_70 = arith.constant 0 : index
    %85 = vector.load %arg13[%c0_69, %c0_70] : memref<4x4xf32, #tpu.memory_space<vmem>>, vector<4x4xf32>
    tpu.vector_store %arg13[%c0_69, %c0_70], %84 {strides = array<i32>} : memref<4x4xf32, #tpu.memory_space<vmem>>, vector<4x4xf32>,
    %c0_71 = arith.constant 0 : index
    %c0_72 = arith.constant 0 : index
    %86 = vector.load %arg14[%c0_71, %c0_72] : memref<4x4xf32, #tpu.memory_space<vmem>>, vector<4x4xf32>
    %87 = vector.extract_strided_slice %0 {offsets = [0, 0, 0], sizes = [1, 4, 128], strides = [1, 1, 1]} : vector<2x4x128xf32> to vector<1x4x128xf32>
    %88 = vector.shape_cast %87 : vector<1x4x128xf32> to vector<4x128xf32>
    %89 = vector.extract_strided_slice %0 {offsets = [1, 0, 0], sizes = [1, 4, 128], strides = [1, 1, 1]} : vector<2x4x128xf32> to vector<1x4x128xf32>
    %90 = vector.shape_cast %89 : vector<1x4x128xf32> to vector<4x128xf32>
    %cst_73 = arith.constant dense<0.000000e+00> : vector<4x4xf32>
    %91 = tpu.matmul %88, %90, %cst_73 {dimension_numbers = #tpu.dot_dimension_numbers<[1], [1], [0], [0], [0, 0, 1, 0], [], []>} : vector<4x128xf32>, vector<4x128xf32>, vector<4x4xf32> -> vector<4x4xf32>
    %92 = arith.addf %86, %91 : vector<4x4xf32>
    %c0_74 = arith.constant 0 : index
    %c0_75 = arith.constant 0 : index
    %93 = vector.load %arg14[%c0_74, %c0_75] : memref<4x4xf32, #tpu.memory_space<vmem>>, vector<4x4xf32>
    tpu.vector_store %arg14[%c0_74, %c0_75], %92 {strides = array<i32>} : memref<4x4xf32, #tpu.memory_space<vmem>>, vector<4x4xf32>,
    %c0_i32_76 = arith.constant 0 : i32
    %94 = arith.cmpi eq, %arg0, %c0_i32_76 : i32
    %95 = arith.extui %94 : i1 to i32
    %c0_i32_77 = arith.constant 0 : i32
    %96 = arith.cmpi ne, %95, %c0_i32_77 : i32
    scf.if %96 {
      %c0_78 = arith.constant 0 : index
      %c0_79 = arith.constant 0 : index
      %c0_80 = arith.constant 0 : index
      %97 = vector.load %arg6[%c0_78, %c0_79, %c0_80] : memref<2x4x1xf32, #tpu.memory_space<vmem>>, vector<2x4x1xf32>
      %c0_81 = arith.constant 0 : index
      %c0_82 = arith.constant 0 : index
      %c0_83 = arith.constant 0 : index
      %98 = vector.load %arg5[%c0_81, %c0_82, %c0_83] : memref<2x4x1xf32, #tpu.memory_space<vmem>>, vector<2x4x1xf32>
      %cst_84 = arith.constant 0.000000e+00 : f32
      %99 = vector.broadcast %cst_84 : f32 to vector<2x4x1xf32>
      %100 = arith.subf %99, %98 : vector<2x4x1xf32>
      %101 = math.exp %100 : vector<2x4x1xf32>
      %cst_85 = arith.constant 9.600000e+01 : f32
      %102 = vector.broadcast %cst_85 : f32 to vector<2x4x1xf32>
      %103 = arith.mulf %102, %101 : vector<2x4x1xf32>
      %104 = arith.subf %97, %103 : vector<2x4x1xf32>
      %c0_86 = arith.constant 0 : index
      %c0_87 = arith.constant 0 : index
      %c0_88 = arith.constant 0 : index
      %105 = vector.load %arg7[%c0_86, %c0_87, %c0_88] : memref<2x4x1xf32, #tpu.memory_space<vmem>>, vector<2x4x1xf32>
      %c0_89 = arith.constant 0 : index
      %c0_90 = arith.constant 0 : index
      %c0_91 = arith.constant 0 : index
      %106 = vector.load %arg5[%c0_89, %c0_90, %c0_91] : memref<2x4x1xf32, #tpu.memory_space<vmem>>, vector<2x4x1xf32>
      %cst_92 = arith.constant 0.000000e+00 : f32
      %107 = vector.broadcast %cst_92 : f32 to vector<2x4x1xf32>
      %108 = arith.subf %107, %106 : vector<2x4x1xf32>
      %cst_93 = arith.constant 2.500000e-01 : f32
      %109 = vector.broadcast %cst_93 : f32 to vector<2x4x1xf32>
      %110 = arith.mulf %108, %109 : vector<2x4x1xf32>
      %111 = math.exp %110 : vector<2x4x1xf32>
      %cst_94 = arith.constant 9.600000e+01 : f32
      %112 = vector.broadcast %cst_94 : f32 to vector<2x4x1xf32>
      %113 = arith.mulf %112, %111 : vector<2x4x1xf32>
      %114 = arith.subf %105, %113 : vector<2x4x1xf32>
      %c0_95 = arith.constant 0 : index
      %c0_96 = arith.constant 0 : index
      %c0_97 = arith.constant 0 : index
      %115 = vector.load %arg9[%c0_95, %c0_96, %c0_97] : memref<2x4x1xf32, #tpu.memory_space<vmem>>, vector<2x4x1xf32>
      %c0_98 = arith.constant 0 : index
      %c0_99 = arith.constant 0 : index
      %c0_100 = arith.constant 0 : index
      %116 = vector.load %arg8[%c0_98, %c0_99, %c0_100] : memref<2x4x1xf32, #tpu.memory_space<vmem>>, vector<2x4x1xf32>
      %cst_101 = arith.constant 0.000000e+00 : f32
      %117 = vector.broadcast %cst_101 : f32 to vector<2x4x1xf32>
      %118 = arith.subf %117, %116 : vector<2x4x1xf32>
      %cst_102 = arith.constant 2.500000e-01 : f32
      %119 = vector.broadcast %cst_102 : f32 to vector<2x4x1xf32>
      %120 = arith.mulf %118, %119 : vector<2x4x1xf32>
      %121 = math.exp %120 : vector<2x4x1xf32>
      %cst_103 = arith.constant 9.600000e+01 : f32
      %122 = vector.broadcast %cst_103 : f32 to vector<2x4x1xf32>
      %123 = arith.mulf %122, %121 : vector<2x4x1xf32>
      %124 = arith.subf %115, %123 : vector<2x4x1xf32>
      %c0_104 = arith.constant 0 : index
      %c0_105 = arith.constant 0 : index
      %c0_106 = arith.constant 0 : index
      %125 = vector.load %arg5[%c0_104, %c0_105, %c0_106] : memref<2x4x1xf32, #tpu.memory_space<vmem>>, vector<2x4x1xf32>
      %126 = math.log %104 : vector<2x4x1xf32>
      %127 = arith.addf %125, %126 : vector<2x4x1xf32>
      %c0_107 = arith.constant 0 : index
      %c0_108 = arith.constant 0 : index
      %c0_109 = arith.constant 0 : index
      %128 = vector.load %arg1[%c0_107, %c0_108, %c0_109] : memref<2x4x1xf32, #tpu.memory_space<vmem>>, vector<2x4x1xf32>
      %129 = arith.subf %127, %128 : vector<2x4x1xf32>
      %130 = vector.shape_cast %129 : vector<2x4x1xf32> to vector<1x2x4x1xf32>
      %cst_110 = arith.constant dense<0.000000e+00> : vector<1xf32>
      %131 = vector.multi_reduction <add>, %130, %cst_110 [1, 2, 3] : vector<1x2x4x1xf32> to vector<1xf32>
      %132 = vector.shape_cast %131 : vector<1xf32> to vector<1x1x1x1xf32>
      %133 = vector.extract %132[0, 0, 0, 0] : f32 from vector<1x1x1x1xf32>
      %cst_111 = arith.constant 1.250000e-01 : f32
      %134 = arith.mulf %133, %cst_111 : f32
      %c0_112 = arith.constant 0 : index
      %c0_113 = arith.constant 0 : index
      %c0_114 = arith.constant 0 : index
      %135 = vector.load %arg5[%c0_112, %c0_113, %c0_114] : memref<2x4x1xf32, #tpu.memory_space<vmem>>, vector<2x4x1xf32>
      %cst_115 = arith.constant 2.500000e-01 : f32
      %136 = vector.broadcast %cst_115 : f32 to vector<2x4x1xf32>
      %137 = arith.mulf %135, %136 : vector<2x4x1xf32>
      %138 = math.log %114 : vector<2x4x1xf32>
      %139 = arith.addf %137, %138 : vector<2x4x1xf32>
      %c0_116 = arith.constant 0 : index
      %c0_117 = arith.constant 0 : index
      %c0_118 = arith.constant 0 : index
      %140 = vector.load %arg8[%c0_116, %c0_117, %c0_118] : memref<2x4x1xf32, #tpu.memory_space<vmem>>, vector<2x4x1xf32>
      %cst_119 = arith.constant 2.500000e-01 : f32
      %141 = vector.broadcast %cst_119 : f32 to vector<2x4x1xf32>
      %142 = arith.mulf %140, %141 : vector<2x4x1xf32>
      %143 = math.log %124 : vector<2x4x1xf32>
      %144 = arith.addf %142, %143 : vector<2x4x1xf32>
      %c0_120 = arith.constant 0 : index
      %c0_121 = arith.constant 0 : index
      %c0_122 = arith.constant 0 : index
      %145 = vector.load %arg10[%c0_120, %c0_121, %c0_122] : memref<2x4x1xf32, #tpu.memory_space<vmem>>, vector<2x4x1xf32>
      %146 = arith.divf %145, %124 : vector<2x4x1xf32>
      %147 = arith.subf %139, %144 : vector<2x4x1xf32>
      %148 = arith.addf %146, %147 : vector<2x4x1xf32>
      %cst_123 = arith.constant 1.600000e+01 : f32
      %149 = vector.broadcast %cst_123 : f32 to vector<2x4x1xf32>
      %150 = arith.mulf %148, %149 : vector<2x4x1xf32>
      %151 = vector.shape_cast %150 : vector<2x4x1xf32> to vector<1x2x4x1xf32>
      %cst_124 = arith.constant dense<0.000000e+00> : vector<1xf32>
      %152 = vector.multi_reduction <add>, %151, %cst_124 [1, 2, 3] : vector<1x2x4x1xf32> to vector<1xf32>
      %153 = vector.shape_cast %152 : vector<1xf32> to vector<1x1x1x1xf32>
      %154 = vector.extract %153[0, 0, 0, 0] : f32 from vector<1x1x1x1xf32>
      %cst_125 = arith.constant 1.250000e-01 : f32
      %155 = arith.mulf %154, %cst_125 : f32
      %c0_126 = arith.constant 0 : index
      %c0_127 = arith.constant 0 : index
      %156 = vector.load %arg13[%c0_126, %c0_127] : memref<4x4xf32, #tpu.memory_space<vmem>>, vector<4x4xf32>
      %c0_128 = arith.constant 0 : index
      %c0_129 = arith.constant 0 : index
      %c0_130 = arith.constant 0 : index
      %157 = vector.load %arg12[%c0_128, %c0_129, %c0_130] : memref<2x4x1xf32, #tpu.memory_space<vmem>>, vector<2x4x1xf32>
      %158 = vector.extract_strided_slice %157 {offsets = [0, 0, 0], sizes = [1, 4, 1], strides = [1, 1, 1]} : vector<2x4x1xf32> to vector<1x4x1xf32>
      %159 = vector.shape_cast %158 : vector<1x4x1xf32> to vector<4x1xf32>
      %cst_131 = arith.constant 1.000000e-24 : f32
      %160 = vector.broadcast %cst_131 : f32 to vector<4x1xf32>
      %161 = arith.maximumf %159, %160 : vector<4x1xf32>
      %162 = math.rsqrt %161 : vector<4x1xf32>
      %163 = vector.extract_strided_slice %157 {offsets = [1, 0, 0], sizes = [1, 4, 1], strides = [1, 1, 1]} : vector<2x4x1xf32> to vector<1x4x1xf32>
      %164 = vector.shape_cast %163 : vector<1x4x1xf32> to vector<4x1xf32>
      %cst_132 = arith.constant 1.000000e-24 : f32
      %165 = vector.broadcast %cst_132 : f32 to vector<4x1xf32>
      %166 = arith.maximumf %164, %165 : vector<4x1xf32>
      %167 = math.rsqrt %166 : vector<4x1xf32>
      %cst_133 = arith.constant dense<0.000000e+00> : vector<4x4xf32>
      %168 = tpu.matmul %162, %167, %cst_133 {dimension_numbers = #tpu.dot_dimension_numbers<[1], [1], [0], [0], [0, 0, 1, 0], [], []>} : vector<4x1xf32>, vector<4x1xf32>, vector<4x4xf32> -> vector<4x4xf32>
      %169 = arith.mulf %156, %168 : vector<4x4xf32>
      %cst_134 = arith.constant 2.000000e+00 : f32
      %170 = vector.broadcast %cst_134 : f32 to vector<4x4xf32>
      %171 = arith.mulf %170, %169 : vector<4x4xf32>
      %cst_135 = arith.constant 2.000000e+00 : f32
      %172 = vector.broadcast %cst_135 : f32 to vector<4x4xf32>
      %173 = arith.subf %172, %171 : vector<4x4xf32>
      %cst_136 = arith.constant 0.000000e+00 : f32
      %174 = vector.broadcast %cst_136 : f32 to vector<4x4xf32>
      %175 = arith.maximumf %173, %174 : vector<4x4xf32>
      %cst_137 = arith.constant 9.99999993E-9 : f32
      %176 = vector.broadcast %cst_137 : f32 to vector<4x4xf32>
      %177 = arith.addf %175, %176 : vector<4x4xf32>
      %178 = math.sqrt %177 : vector<4x4xf32>
      %c0_138 = arith.constant 0 : index
      %c0_139 = arith.constant 0 : index
      %179 = vector.load %arg14[%c0_138, %c0_139] : memref<4x4xf32, #tpu.memory_space<vmem>>, vector<4x4xf32>
      %c0_140 = arith.constant 0 : index
      %c0_141 = arith.constant 0 : index
      %c0_142 = arith.constant 0 : index
      %180 = vector.load %arg11[%c0_140, %c0_141, %c0_142] : memref<2x4x1xf32, #tpu.memory_space<vmem>>, vector<2x4x1xf32>
      %181 = vector.extract_strided_slice %180 {offsets = [0, 0, 0], sizes = [1, 4, 1], strides = [1, 1, 1]} : vector<2x4x1xf32> to vector<1x4x1xf32>
      %182 = vector.shape_cast %181 : vector<1x4x1xf32> to vector<4x1xf32>
      %cst_143 = arith.constant 1.000000e-24 : f32
      %183 = vector.broadcast %cst_143 : f32 to vector<4x1xf32>
      %184 = arith.maximumf %182, %183 : vector<4x1xf32>
      %185 = math.rsqrt %184 : vector<4x1xf32>
      %186 = vector.extract_strided_slice %180 {offsets = [1, 0, 0], sizes = [1, 4, 1], strides = [1, 1, 1]} : vector<2x4x1xf32> to vector<1x4x1xf32>
      %187 = vector.shape_cast %186 : vector<1x4x1xf32> to vector<4x1xf32>
      %cst_144 = arith.constant 1.000000e-24 : f32
      %188 = vector.broadcast %cst_144 : f32 to vector<4x1xf32>
      %189 = arith.maximumf %187, %188 : vector<4x1xf32>
      %190 = math.rsqrt %189 : vector<4x1xf32>
      %cst_145 = arith.constant dense<0.000000e+00> : vector<4x4xf32>
      %191 = tpu.matmul %185, %190, %cst_145 {dimension_numbers = #tpu.dot_dimension_numbers<[1], [1], [0], [0], [0, 0, 1, 0], [], []>} : vector<4x1xf32>, vector<4x1xf32>, vector<4x4xf32> -> vector<4x4xf32>
      %192 = arith.mulf %179, %191 : vector<4x4xf32>
      %cst_146 = arith.constant 2.000000e+00 : f32
      %193 = vector.broadcast %cst_146 : f32 to vector<4x4xf32>
      %194 = arith.mulf %193, %192 : vector<4x4xf32>
      %cst_147 = arith.constant 2.000000e+00 : f32
      %195 = vector.broadcast %cst_147 : f32 to vector<4x4xf32>
      %196 = arith.subf %195, %194 : vector<4x4xf32>
      %cst_148 = arith.constant 0.000000e+00 : f32
      %197 = vector.broadcast %cst_148 : f32 to vector<4x4xf32>
      %198 = arith.maximumf %196, %197 : vector<4x4xf32>
      %cst_149 = arith.constant 9.99999993E-9 : f32
      %199 = vector.broadcast %cst_149 : f32 to vector<4x4xf32>
      %200 = arith.addf %198, %199 : vector<4x4xf32>
      %201 = math.sqrt %200 : vector<4x4xf32>
      %cst_150 = arith.constant 0.000000e+00 : f32
      %202 = vector.broadcast %cst_150 : f32 to vector<4x4xf32>
      %203 = arith.subf %202, %169 : vector<4x4xf32>
      %cst_151 = arith.constant 2.500000e-01 : f32
      %204 = vector.broadcast %cst_151 : f32 to vector<4x4xf32>
      %205 = arith.mulf %203, %204 : vector<4x4xf32>
      %cst_152 = arith.constant 9.99999993E-9 : f32
      %206 = vector.broadcast %cst_152 : f32 to vector<4x4xf32>
      %207 = arith.addf %205, %206 : vector<4x4xf32>
      %cst_153 = arith.constant dense<0xFF800000> : vector<4xf32>
      %208 = vector.multi_reduction <maximumf>, %207, %cst_153 [1] : vector<4x4xf32> to vector<4xf32>
      %209 = vector.shape_cast %208 : vector<4xf32> to vector<4x1xf32>
      %cst_154 = arith.constant dense<0xFF800000> : vector<1xf32>
      %210 = vector.multi_reduction <maximumf>, %209, %cst_154 [0] : vector<4x1xf32> to vector<1xf32>
      %211 = vector.shape_cast %210 : vector<1xf32> to vector<1x1xf32>
      %212 = vector.broadcast %211 : vector<1x1xf32> to vector<4x4xf32>
      %213 = arith.subf %207, %212 : vector<4x4xf32>
      %214 = math.exp %213 : vector<4x4xf32>
      %cst_155 = arith.constant dense<0.000000e+00> : vector<4xf32>
      %215 = vector.multi_reduction <add>, %214, %cst_155 [1] : vector<4x4xf32> to vector<4xf32>
      %216 = vector.shape_cast %215 : vector<4xf32> to vector<4x1xf32>
      %cst_156 = arith.constant dense<0.000000e+00> : vector<1xf32>
      %217 = vector.multi_reduction <add>, %216, %cst_156 [0] : vector<4x1xf32> to vector<1xf32>
      %218 = vector.shape_cast %217 : vector<1xf32> to vector<1x1xf32>
      %cst_157 = arith.constant 1.600000e+01 : f32
      %219 = vector.broadcast %cst_157 : f32 to vector<1x1xf32>
      %220 = arith.divf %219, %218 : vector<1x1xf32>
      %221 = vector.broadcast %220 : vector<1x1xf32> to vector<4x4xf32>
      %222 = arith.mulf %214, %221 : vector<4x4xf32>
      %223 = arith.subf %192, %169 : vector<4x4xf32>
      %224 = arith.mulf %223, %223 : vector<4x4xf32>
      %225 = arith.mulf %222, %224 : vector<4x4xf32>
      %cst_158 = arith.constant 2.500000e-01 : f32
      %226 = vector.broadcast %cst_158 : f32 to vector<4x4xf32>
      %227 = arith.mulf %178, %226 : vector<4x4xf32>
      %cst_159 = arith.constant 9.99999993E-9 : f32
      %228 = vector.broadcast %cst_159 : f32 to vector<4x4xf32>
      %229 = arith.addf %227, %228 : vector<4x4xf32>
      %cst_160 = arith.constant dense<0xFF800000> : vector<4xf32>
      %230 = vector.multi_reduction <maximumf>, %229, %cst_160 [1] : vector<4x4xf32> to vector<4xf32>
      %231 = vector.shape_cast %230 : vector<4xf32> to vector<4x1xf32>
      %cst_161 = arith.constant dense<0xFF800000> : vector<1xf32>
      %232 = vector.multi_reduction <maximumf>, %231, %cst_161 [0] : vector<4x1xf32> to vector<1xf32>
      %233 = vector.shape_cast %232 : vector<1xf32> to vector<1x1xf32>
      %234 = vector.broadcast %233 : vector<1x1xf32> to vector<4x4xf32>
      %235 = arith.subf %229, %234 : vector<4x4xf32>
      %236 = math.exp %235 : vector<4x4xf32>
      %cst_162 = arith.constant dense<0.000000e+00> : vector<4xf32>
      %237 = vector.multi_reduction <add>, %236, %cst_162 [1] : vector<4x4xf32> to vector<4xf32>
      %238 = vector.shape_cast %237 : vector<4xf32> to vector<4x1xf32>
      %cst_163 = arith.constant dense<0.000000e+00> : vector<1xf32>
      %239 = vector.multi_reduction <add>, %238, %cst_163 [0] : vector<4x1xf32> to vector<1xf32>
      %240 = vector.shape_cast %239 : vector<1xf32> to vector<1x1xf32>
      %cst_164 = arith.constant 1.600000e+01 : f32
      %241 = vector.broadcast %cst_164 : f32 to vector<1x1xf32>
      %242 = arith.divf %241, %240 : vector<1x1xf32>
      %243 = vector.broadcast %242 : vector<1x1xf32> to vector<4x4xf32>
      %244 = arith.mulf %236, %243 : vector<4x4xf32>
      %245 = arith.subf %201, %178 : vector<4x4xf32>
      %246 = arith.mulf %245, %245 : vector<4x4xf32>
      %247 = arith.mulf %244, %246 : vector<4x4xf32>
      %248 = arith.addf %225, %247 : vector<4x4xf32>
      %249 = vector.shape_cast %248 : vector<4x4xf32> to vector<1x4x4xf32>
      %cst_165 = arith.constant dense<0.000000e+00> : vector<1xf32>
      %250 = vector.multi_reduction <add>, %249, %cst_165 [1, 2] : vector<1x4x4xf32> to vector<1xf32>
      %251 = vector.shape_cast %250 : vector<1xf32> to vector<1x1x1xf32>
      %252 = vector.extract %251[0, 0, 0] : f32 from vector<1x1x1xf32>
      %cst_166 = arith.constant 6.250000e-02 : f32
      %253 = arith.mulf %252, %cst_166 : f32
      %cst_167 = arith.constant 1.000000e+00 : f32
      %254 = arith.mulf %cst_167, %134 : f32
      %cst_168 = arith.constant 0.899999976 : f32
      %255 = arith.mulf %cst_168, %155 : f32
      %256 = arith.addf %254, %255 : f32
      %cst_169 = arith.constant 1.000000e-01 : f32
      %257 = arith.mulf %cst_169, %253 : f32
      %258 = arith.addf %256, %257 : f32
      %c0_170 = arith.constant 0 : index
      %259 = memref.load %arg4[%c0_170] : memref<1xf32, #tpu.memory_space<smem>>
      memref.store %258, %arg4[%c0_170] : memref<1xf32, #tpu.memory_space<smem>>
    } else {
    }
    return
  }
  func.func @transform_0(%arg0: i32) -> (i32, i32, i32) {
    %c0_i32 = arith.constant 0 : i32
    %c0_i32_0 = arith.constant 0 : i32
    %c0_i32_1 = arith.constant 0 : i32
    %c0_i32_2 = arith.constant 0 : i32
    return %c0_i32, %c0_i32_0, %c0_i32_1 : i32, i32, i32
  }
  func.func @transform_1(%arg0: i32) -> (i32, i32, i32) {
    %c0_i32 = arith.constant 0 : i32
    %c0_i32_0 = arith.constant 0 : i32
    %c0_i32_1 = arith.constant 0 : i32
    return %c0_i32, %c0_i32_0, %arg0 : i32, i32, i32
  }
  func.func @transform_2(%arg0: i32) -> (i32, i32, i32) {
    %c0_i32 = arith.constant 0 : i32
    %c0_i32_0 = arith.constant 0 : i32
    %c0_i32_1 = arith.constant 0 : i32
    return %c0_i32, %c0_i32_0, %arg0 : i32, i32, i32
  }
  func.func @transform_3(%arg0: i32) -> i32 {
    %c0_i32 = arith.constant 0 : i32
    %c0_i32_0 = arith.constant 0 : i32
    return %c0_i32 : i32
  }
}

</mosaic_0001>

<llo_original>
// kernel: tpu_custom_call.1
$region0: #{tpu_custom_call.1}
  #allocation0 [shape = 'u32[]', space=smem, size = 0x4, offset = 0x4, fixed_abs, tag = 'smem constant byte address 0x4 - core index']
  #allocation1 [shape = 'u32[72,128]{1,0:T(1,128)}', space=vmem, size = 0x9000, scoped, tag = 'internal scratch']
  #allocation2 [shape = 'f32[2,4,1]{2,1,0:T(4,128)}', space=vmem, size = 0x1000, scoped, tag = 'scratch operand']
  #allocation3 [shape = 'f32[2,4,1]{2,1,0:T(4,128)}', space=vmem, size = 0x1000, scoped, tag = 'scratch operand']
  #allocation4 [shape = 'f32[2,4,1]{2,1,0:T(4,128)}', space=vmem, size = 0x1000, scoped, tag = 'scratch operand']
  #allocation5 [shape = 'f32[2,4,1]{2,1,0:T(4,128)}', space=vmem, size = 0x1000, scoped, tag = 'scratch operand']
  #allocation6 [shape = 'f32[2,4,1]{2,1,0:T(4,128)}', space=vmem, size = 0x1000, scoped, tag = 'scratch operand']
  #allocation7 [shape = 'f32[2,4,1]{2,1,0:T(4,128)}', space=vmem, size = 0x1000, scoped, tag = 'scratch operand']
  #allocation8 [shape = 'f32[2,4,1]{2,1,0:T(4,128)}', space=vmem, size = 0x1000, scoped, tag = 'scratch operand']
  #allocation9 [shape = 'f32[2,4,1]{2,1,0:T(4,128)}', space=vmem, size = 0x1000, scoped, tag = 'scratch operand']
  #allocation10 [shape = 'f32[4,4]{1,0:T(4,128)}', space=vmem, size = 0x800, scoped, tag = 'scratch operand']
  #allocation11 [shape = 'f32[4,4]{1,0:T(4,128)}', space=vmem, size = 0x800, scoped, tag = 'scratch operand']
  %s0 = inlined_call_operand.vmem [shape: f32[2,4,1], index: 0, kind: input, shape index: {}]
  %s1 = inlined_call_operand.vmem [shape: f32[2,4,128], index: 1, kind: input, shape index: {}]
  %s2 = inlined_call_operand.hbm [shape: f32[2,4,128], index: 2, kind: input, shape index: {}]
  %s3 = inlined_call_operand.hbm [shape: f32[1], index: 3, kind: output, shape index: {}]
  %s4 = sld [smem:[#allocation0]]
  $region34: #{tpu_custom_call.1} parent=0
    _
  %s6 = ssub.s32 1, %s4
  %s7 = scalar_select 0, %s6, %s4
  $region1: #{tpu_custom_call.1} parent=0
    #allocation12 [shape = 'u8[4096]{0}', space=vmem, size = 0x1000, scoped, tag = 'input window, operand 2, single buffered']
    #allocation13 [shape = 's32[1]{0}', space=sflag, size = 0x4, scoped, tag = 'scoped memory for tpu_custom_call.1']
    #allocation14 [shape = 's32[1]{0}', space=sflag, size = 0x4, scoped, tag = 'scoped memory for tpu_custom_call.1']
    #allocation15 [shape = 'u8[512]{0}', space=smem, size = 0x200, scoped, tag = 'output window, operand 0, single buffered']
    %8 = vsyncpa [#allocation13], 0
    %9 = vsyncpa [#allocation14], 0
    // Predicated region
    $region2: #{tpu_custom_call.1} parent=1 // pred_check
      _
    $region3: #{tpu_custom_call.1} parent=1 // pred_check_branch
      %11 = sbr.rel (0) target = $region5
    $region4: #{tpu_custom_call.1} parent=1 // pred_region
      _
    $region5: #{tpu_custom_call.1} parent=1 // pred_fallthru
      _
    // Predicated region
    $region6: #{tpu_custom_call.1} parent=1 // pred_check
      _
    $region7: #{tpu_custom_call.1} parent=1 // pred_check_branch
      %13 = sbr.rel (0) target = $region9
    $region8: #{tpu_custom_call.1} parent=1 // pred_region
      _
    $region9: #{tpu_custom_call.1} parent=1 // pred_fallthru
      _
    // Predicated region
    $region10: #{tpu_custom_call.1} parent=1 // pred_check
      _
    $region11: #{tpu_custom_call.1} parent=1 // pred_check_branch
      %15 = sbr.rel (0) target = $region13
    $region12: #{tpu_custom_call.1} parent=1 // pred_region
      %17 = vsyncadd [#allocation13], 0
      %s18 = sshll.u32 %s2, 4
      %s19 = int_to_ptr.hbm [resolvable:$true] %s18
      %s20 = sshll.u32 [#allocation12], 4
      %s21 = int_to_ptr.vmem [resolvable:$true] %s20
      %26 = dma.hbm_to_vmem [thread:$0]  %s19, 128, %s21, [#allocation13], 64, 64, 4
    $region13: #{tpu_custom_call.1} parent=1 // pred_fallthru
      _
    // Predicated region
    $region14: #{tpu_custom_call.1} parent=1 // pred_check
      _
    $region15: #{tpu_custom_call.1} parent=1 // pred_check_branch
      %28 = sbr.rel (0) target = $region17
    $region16: #{tpu_custom_call.1} parent=1 // pred_region
      %30 = dma.done [#allocation13], 128
    $region17: #{tpu_custom_call.1} parent=1 // pred_fallthru
      _
    %v31 = vld [vmem:[%s1] sm:$0xf]
    %v32 = vld [vmem:[%s1 + $0x4] sm:$0xf]
    %v33 = vld [vmem:[#allocation12] sm:$0xf]
    %v34 = vld [vmem:[#allocation12 + $0x4] sm:$0xf]
    %p35 = scmp.eq.s32.totalorder 0, 0
    // Predicated region
    $region18: #{tpu_custom_call.1} parent=1 // pred_check
      %p36 = pneg %p35
    $region19: #{tpu_custom_call.1} parent=1 // pred_check_branch
      %38 = sbr.rel (%p36) target = $region21
    $region20: #{tpu_custom_call.1} parent=1 // pred_region
      %vm39 = vcmask 3072
      %40 = vst.msk [vmem:[#allocation2] sm:$0xf] %vm39, -1e+30
      %41 = vst.msk [vmem:[#allocation2 + $0x4] sm:$0xf] %vm39, -1e+30
      %42 = vst.msk [vmem:[#allocation5] sm:$0xf] %vm39, -1e+30
      %43 = vst.msk [vmem:[#allocation5 + $0x4] sm:$0xf] %vm39, -1e+30
      %44 = vst.msk [vmem:[#allocation3] sm:$0xf] %vm39, 0.0
      %45 = vst.msk [vmem:[#allocation3 + $0x4] sm:$0xf] %vm39, 0.0
      %46 = vst.msk [vmem:[#allocation4] sm:$0xf] %vm39, 0.0
      %47 = vst.msk [vmem:[#allocation4 + $0x4] sm:$0xf] %vm39, 0.0
      %48 = vst.msk [vmem:[#allocation6] sm:$0xf] %vm39, 0.0
      %49 = vst.msk [vmem:[#allocation6 + $0x4] sm:$0xf] %vm39, 0.0
      %50 = vst.msk [vmem:[#allocation7] sm:$0xf] %vm39, 0.0
      %51 = vst.msk [vmem:[#allocation7 + $0x4] sm:$0xf] %vm39, 0.0
      %52 = vst.msk [vmem:[#allocation8] sm:$0xf] %vm39, 0.0
      %53 = vst.msk [vmem:[#allocation8 + $0x4] sm:$0xf] %vm39, 0.0
      %54 = vst.msk [vmem:[#allocation9] sm:$0xf] %vm39, 0.0
      %55 = vst.msk [vmem:[#allocation9 + $0x4] sm:$0xf] %vm39, 0.0
      %vm56 = vcmask 27648
      %57 = vst.msk [vmem:[#allocation10] sm:$0xf] %vm56, 0.0
      %58 = vst.msk [vmem:[#allocation11] sm:$0xf] %vm56, 0.0
    $region21: #{tpu_custom_call.1} parent=1 // pred_fallthru
      _
    %v59 = vld [vmem:[#allocation2] sm:$0xf]
    %v60 = vld [vmem:[#allocation2 + $0x4] sm:$0xf]
    %vm61 = vcmask 1043456
    %v62 = vsel %vm61, %v31, -inf
    %63 = vmax.xlane.f32.xlu0 %v62
    %v64 = vpop.xlane.xlu0 %63
    %v65 = vsel %vm61, %v32, -inf
    %66 = vmax.xlane.f32.xlu0 %v65
    %v67 = vpop.xlane.xlu0 %66
    %v68 = vmax.f32 %v59, %v64
    %v69 = vmax.f32 %v60, %v67
    %v70 = vsub.f32 %v59, %v68
    %v71 = vsub.f32 %v60, %v69
    %v72 = vmul.f32 %v70, 1.442695
    %v73 = vpow.pop %v72
    %v74 = vmul.f32 %v71, 1.442695
    %v75 = vpow.pop %v74
    %v76 = vld [vmem:[#allocation3] sm:$0xf]
    %v77 = vld [vmem:[#allocation3 + $0x4] sm:$0xf]
    %v78 = vmul.f32 %v73, %v76
    %v79 = vmul.f32 %v75, %v77
    %81 = vset.pattern.permute.xlu0 0
    %82 = vperm.xlu0 %81, %v68
    %v83 = vpop.permute.xlu0 %82
    %86 = vset.pattern.permute.xlu0 0
    %87 = vperm.xlu0 %86, %v69
    %v88 = vpop.permute.xlu0 %87
    %v90 = vsub.f32 %v31, %v83
    %v91 = vsub.f32 %v32, %v88
    %v92 = vmul.f32 %v90, 1.442695
    %v93 = vpow.pop %v92
    %v94 = vmul.f32 %v91, 1.442695
    %v95 = vpow.pop %v94
    %v96 = vsel %vm61, %v93, 0.0
    %97 = vadd.xlane.f32.xlu0 %v96
    %v98 = vpop.xlane.xlu0 %97
    %v99 = vsel %vm61, %v95, 0.0
    %100 = vadd.xlane.f32.xlu0 %v99
    %v101 = vpop.xlane.xlu0 %100
    %v102 = vadd.f32 %v78, %v98
    %v103 = vadd.f32 %v79, %v101
    %vm104 = vcmask 3072
    %105 = vst.msk [vmem:[#allocation3] sm:$0xf] %vm104, %v102
    %106 = vst.msk [vmem:[#allocation3 + $0x4] sm:$0xf] %vm104, %v103
    %v107 = vmul.f32 %v70, 0.25
    %v108 = vmul.f32 %v71, 0.25
    %v109 = vmul.f32 %v107, 1.442695
    %v110 = vpow.pop %v109
    %v111 = vmul.f32 %v108, 1.442695
    %v112 = vpow.pop %v111
    %v113 = vld [vmem:[#allocation4] sm:$0xf]
    %v114 = vld [vmem:[#allocation4 + $0x4] sm:$0xf]
    %v115 = vmul.f32 %v110, %v113
    %v116 = vmul.f32 %v112, %v114
    %v117 = vmul.f32 %v90, 0.25
    %v118 = vmul.f32 %v91, 0.25
    %v119 = vmul.f32 %v117, 1.442695
    %v120 = vpow.pop %v119
    %v121 = vmul.f32 %v118, 1.442695
    %v122 = vpow.pop %v121
    %v123 = vsel %vm61, %v120, 0.0
    %124 = vadd.xlane.f32.xlu0 %v123
    %v125 = vpop.xlane.xlu0 %124
    %v126 = vsel %vm61, %v122, 0.0
    %127 = vadd.xlane.f32.xlu0 %v126
    %v128 = vpop.xlane.xlu0 %127
    %v129 = vadd.f32 %v115, %v125
    %v130 = vadd.f32 %v116, %v128
    %131 = vst.msk [vmem:[#allocation4] sm:$0xf] %vm104, %v129
    %132 = vst.msk [vmem:[#allocation4 + $0x4] sm:$0xf] %vm104, %v130
    %133 = vst.msk [vmem:[#allocation2] sm:$0xf] %vm104, %v68
    %134 = vst.msk [vmem:[#allocation2 + $0x4] sm:$0xf] %vm104, %v69
    %v135 = vld [vmem:[#allocation5] sm:$0xf]
    %v136 = vld [vmem:[#allocation5 + $0x4] sm:$0xf]
    %v137 = vsel %vm61, %v33, -inf
    %138 = vmax.xlane.f32.xlu0 %v137
    %v139 = vpop.xlane.xlu0 %138
    %v140 = vsel %vm61, %v34, -inf
    %141 = vmax.xlane.f32.xlu0 %v140
    %v142 = vpop.xlane.xlu0 %141
    %v143 = vmax.f32 %v135, %v139
    %v144 = vmax.f32 %v136, %v142
    %v145 = vsub.f32 %v135, %v143
    %v146 = vsub.f32 %v136, %v144
    %v147 = vmul.f32 %v145, 0.25
    %v148 = vmul.f32 %v146, 0.25
    %v149 = vmul.f32 %v147, 1.442695
    %v150 = vpow.pop %v149
    %v151 = vmul.f32 %v148, 1.442695
    %v152 = vpow.pop %v151
    %154 = vset.pattern.permute.xlu0 0
    %155 = vperm.xlu0 %154, %v143
    %v156 = vpop.permute.xlu0 %155
    %159 = vset.pattern.permute.xlu0 0
    %160 = vperm.xlu0 %159, %v144
    %v161 = vpop.permute.xlu0 %160
    %v163 = vsub.f32 %v33, %v156
    %v164 = vsub.f32 %v34, %v161
    %v165 = vmul.f32 %v163, 0.25
    %v166 = vmul.f32 %v164, 0.25
    %v167 = vmul.f32 %v165, 1.442695
    %v168 = vpow.pop %v167
    %v169 = vmul.f32 %v166, 1.442695
    %v170 = vpow.pop %v169
    %v171 = vld [vmem:[#allocation6] sm:$0xf]
    %v172 = vld [vmem:[#allocation6 + $0x4] sm:$0xf]
    %v173 = vmul.f32 %v150, %v171
    %v174 = vmul.f32 %v152, %v172
    %v175 = vsel %vm61, %v168, 0.0
    %176 = vadd.xlane.f32.xlu0 %v175
    %v177 = vpop.xlane.xlu0 %176
    %v178 = vsel %vm61, %v170, 0.0
    %179 = vadd.xlane.f32.xlu0 %v178
    %v180 = vpop.xlane.xlu0 %179
    %v181 = vadd.f32 %v173, %v177
    %v182 = vadd.f32 %v174, %v180
    %183 = vst.msk [vmem:[#allocation6] sm:$0xf] %vm104, %v181
    %184 = vst.msk [vmem:[#allocation6 + $0x4] sm:$0xf] %vm104, %v182
    %v185 = vld [vmem:[#allocation7] sm:$0xf]
    %v186 = vld [vmem:[#allocation7 + $0x4] sm:$0xf]
    %v187 = vmul.f32 %v150, %v185
    %v188 = vmul.f32 %v152, %v186
    %v189 = vsub.f32 %v33, %v31
    %v190 = vsub.f32 %v34, %v32
    %v191 = vmul.f32 %v189, 0.25
    %v192 = vmul.f32 %v190, 0.25
    %v193 = vmul.f32 %v168, %v191
    %v194 = vmul.f32 %v170, %v192
    %v195 = vsel %vm61, %v193, 0.0
    %196 = vadd.xlane.f32.xlu0 %v195
    %v197 = vpop.xlane.xlu0 %196
    %v198 = vsel %vm61, %v194, 0.0
    %199 = vadd.xlane.f32.xlu0 %v198
    %v200 = vpop.xlane.xlu0 %199
    %v201 = vadd.f32 %v187, %v197
    %v202 = vadd.f32 %v188, %v200
    %203 = vst.msk [vmem:[#allocation7] sm:$0xf] %vm104, %v201
    %204 = vst.msk [vmem:[#allocation7 + $0x4] sm:$0xf] %vm104, %v202
    %205 = vst.msk [vmem:[#allocation5] sm:$0xf] %vm104, %v143
    %206 = vst.msk [vmem:[#allocation5 + $0x4] sm:$0xf] %vm104, %v144
    %v207 = vld [vmem:[#allocation8] sm:$0xf]
    %v208 = vld [vmem:[#allocation8 + $0x4] sm:$0xf]
    %v209 = vmul.f32 %v31, %v31
    %v210 = vmul.f32 %v32, %v32
    %v211 = vsel %vm61, %v209, 0.0
    %212 = vadd.xlane.f32.xlu0 %v211
    %v213 = vpop.xlane.xlu0 %212
    %v214 = vsel %vm61, %v210, 0.0
    %215 = vadd.xlane.f32.xlu0 %v214
    %v216 = vpop.xlane.xlu0 %215
    %v217 = vadd.f32 %v207, %v213
    %v218 = vadd.f32 %v208, %v216
    %219 = vst.msk [vmem:[#allocation8] sm:$0xf] %vm104, %v217
    %220 = vst.msk [vmem:[#allocation8 + $0x4] sm:$0xf] %vm104, %v218
    %v221 = vld [vmem:[#allocation9] sm:$0xf]
    %v222 = vld [vmem:[#allocation9 + $0x4] sm:$0xf]
    %v223 = vmul.f32 %v33, %v33
    %v224 = vmul.f32 %v34, %v34
    %v225 = vsel %vm61, %v223, 0.0
    %226 = vadd.xlane.f32.xlu0 %v225
    %v227 = vpop.xlane.xlu0 %226
    %v228 = vsel %vm61, %v224, 0.0
    %229 = vadd.xlane.f32.xlu0 %v228
    %v230 = vpop.xlane.xlu0 %229
    %v231 = vadd.f32 %v221, %v227
    %v232 = vadd.f32 %v222, %v230
    %233 = vst.msk [vmem:[#allocation9] sm:$0xf] %vm104, %v231
    %234 = vst.msk [vmem:[#allocation9 + $0x4] sm:$0xf] %vm104, %v232
    %v235 = vld [vmem:[#allocation10] sm:$0xf]
    %236 = vmatpush.xpose.msra.mxu0 0.0
    %237 = vmatpush.xpose.msra.mxu0 0.0
    %238 = vmatpush.xpose.msra.mxu0 0.0
    %239 = vmatpush.xpose.msra.mxu0 0.0
    %240 = vmatpush.xpose.msra.mxu0 0.0
    %241 = vmatpush.xpose.msra.mxu0 0.0
    %242 = vmatpush.xpose.msra.mxu0 0.0
    %243 = vmatpush.xpose.msra.mxu0 0.0
    %244 = vmatpush.xpose.msra.mxu0 0.0
    %245 = vmatpush.xpose.msra.mxu0 0.0
    %246 = vmatpush.xpose.msra.mxu0 0.0
    %247 = vmatpush.xpose.msra.mxu0 0.0
    %248 = vmatpush.xpose.msra.mxu0 0.0
    %249 = vmatpush.xpose.msra.mxu0 0.0
    %250 = vmatpush.xpose.msra.mxu0 0.0
    %251 = vmatpush.xpose.msra.mxu0 %v34
    %252 = vmatmul.f32.gmra.mxu0 %v33
    %v253 = vpop.f32.mrf.mxu0
    %v254 = vadd.f32 0.0, %v253
    %255 = vdwg.mxu0
    %v256 = vadd.f32 %v235, %v254
    %vm257 = vcmask 27648
    %258 = vst.msk [vmem:[#allocation10] sm:$0xf] %vm257, %v256
    %v259 = vld [vmem:[#allocation11] sm:$0xf]
    %260 = vmatpush.xpose.msra.mxu0 0.0
    %261 = vmatpush.xpose.msra.mxu0 0.0
    %262 = vmatpush.xpose.msra.mxu0 0.0
    %263 = vmatpush.xpose.msra.mxu0 0.0
    %264 = vmatpush.xpose.msra.mxu0 0.0
    %265 = vmatpush.xpose.msra.mxu0 0.0
    %266 = vmatpush.xpose.msra.mxu0 0.0
    %267 = vmatpush.xpose.msra.mxu0 0.0
    %268 = vmatpush.xpose.msra.mxu0 0.0
    %269 = vmatpush.xpose.msra.mxu0 0.0
    %270 = vmatpush.xpose.msra.mxu0 0.0
    %271 = vmatpush.xpose.msra.mxu0 0.0
    %272 = vmatpush.xpose.msra.mxu0 0.0
    %273 = vmatpush.xpose.msra.mxu0 0.0
    %274 = vmatpush.xpose.msra.mxu0 0.0
    %275 = vmatpush.xpose.msra.mxu0 %v32
    %276 = vmatmul.f32.gmra.mxu0 %v31
    %v277 = vpop.f32.mrf.mxu0
    %v278 = vadd.f32 0.0, %v277
    %279 = vdwg.mxu0
    %v280 = vadd.f32 %v259, %v278
    %281 = vst.msk [vmem:[#allocation11] sm:$0xf] %vm257, %v280
    // Predicated region
    $region22: #{tpu_custom_call.1} parent=1 // pred_check
      %p282 = pneg %p35
    $region23: #{tpu_custom_call.1} parent=1 // pred_check_branch
      %284 = sbr.rel (%p282) target = $region25
    $region24: #{tpu_custom_call.1} parent=1 // pred_region
      %v285 = vld [vmem:[#allocation3] sm:$0xf]
      %v286 = vld [vmem:[#allocation3 + $0x4] sm:$0xf]
      %v287 = vld [vmem:[#allocation2] sm:$0xf]
      %v288 = vld [vmem:[#allocation2 + $0x4] sm:$0xf]
      %v289 = vsub.f32 0.0, %v287
      %v290 = vsub.f32 0.0, %v288
      %v291 = vmul.f32 %v289, 1.442695
      %v292 = vpow.pop %v291
      %v293 = vmul.f32 %v290, 1.442695
      %v294 = vpow.pop %v293
      %v295 = vmul.f32 %v292, 96.0
      %v296 = vmul.f32 %v294, 96.0
      %v297 = vsub.f32 %v285, %v295
      %v298 = vsub.f32 %v286, %v296
      %v299 = vld [vmem:[#allocation4] sm:$0xf]
      %v300 = vld [vmem:[#allocation4 + $0x4] sm:$0xf]
      %v301 = vmul.f32 %v289, 0.25
      %v302 = vmul.f32 %v290, 0.25
      %v303 = vmul.f32 %v301, 1.442695
      %v304 = vpow.pop %v303
      %v305 = vmul.f32 %v302, 1.442695
      %v306 = vpow.pop %v305
      %v307 = vmul.f32 %v304, 96.0
      %v308 = vmul.f32 %v306, 96.0
      %v309 = vsub.f32 %v299, %v307
      %v310 = vsub.f32 %v300, %v308
      %v311 = vld [vmem:[#allocation6] sm:$0xf]
      %v312 = vld [vmem:[#allocation6 + $0x4] sm:$0xf]
      %v313 = vld [vmem:[#allocation5] sm:$0xf]
      %v314 = vld [vmem:[#allocation5 + $0x4] sm:$0xf]
      %v315 = vsub.f32 0.0, %v313
      %v316 = vsub.f32 0.0, %v314
      %v317 = vmul.f32 %v315, 0.25
      %v318 = vmul.f32 %v316, 0.25
      %v319 = vmul.f32 %v317, 1.442695
      %v320 = vpow.pop %v319
      %v321 = vmul.f32 %v318, 1.442695
      %v322 = vpow.pop %v321
      %v323 = vmul.f32 %v320, 96.0
      %v324 = vmul.f32 %v322, 96.0
      %v325 = vsub.f32 %v311, %v323
      %v326 = vsub.f32 %v312, %v324
      %v327 = vlog2.pop %v297
      %v328 = vmul.f32 %v327, 0.6931472
      %v329 = vlog2.pop %v298
      %v330 = vmul.f32 %v329, 0.6931472
      %v331 = vadd.f32 %v287, %v328
      %v332 = vadd.f32 %v288, %v330
      %v333 = vld [vmem:[%s0] sm:$0xf]
      %v334 = vld [vmem:[%s0 + $0x4] sm:$0xf]
      %v335 = vsub.f32 %v331, %v333
      %v336 = vsub.f32 %v332, %v334
      %v337 = vsel %vm104, %v335, 0.0
      %v338 = vsel %vm104, %v336, 0.0
      %v339 = vadd.f32 %v337, %v338
      %340 = vadd.xlane.f32.xlu0 %v339
      %v341 = vpop.xlane.xlu0 %340
      %v342 = vrot.slane %v341, 4
      %v343 = vadd.f32 %v341, %v342
      %v344 = vrot.slane %v343, 2
      %v345 = vadd.f32 %v343, %v344
      %v346 = vrot.slane %v345, 1
      %v347 = vadd.f32 %v345, %v346
      %s348 = vtos %v347
      %s349 = smul.f32 %s348, 0.125
      %v350 = vmul.f32 %v287, 0.25
      %v351 = vmul.f32 %v288, 0.25
      %v352 = vlog2.pop %v309
      %v353 = vmul.f32 %v352, 0.6931472
      %v354 = vlog2.pop %v310
      %v355 = vmul.f32 %v354, 0.6931472
      %v356 = vadd.f32 %v350, %v353
      %v357 = vadd.f32 %v351, %v355
      %v358 = vmul.f32 %v313, 0.25
      %v359 = vmul.f32 %v314, 0.25
      %v360 = vlog2.pop %v325
      %v361 = vmul.f32 %v360, 0.6931472
      %v362 = vlog2.pop %v326
      %v363 = vmul.f32 %v362, 0.6931472
      %v364 = vadd.f32 %v358, %v361
      %v365 = vadd.f32 %v359, %v363
      %v366 = vld [vmem:[#allocation7] sm:$0xf]
      %v367 = vld [vmem:[#allocation7 + $0x4] sm:$0xf]
      %v368 = vrcp.pop %v325
      %v369 = vmul.f32 %v325, %v368
      %v370 = vsub.f32 1.0, %v369
      %v371 = vmul.f32 %v368, %v370
      %v372 = vadd.f32 %v368, %v371
      %vm373 = vweird.f32 %v325
      %vm374 = vweird.f32 %v368
      %vm375 = vmor %vm373, %vm374
      %v376 = vsel %vm375, %v368, %v372
      %v377 = vand.u32 2147483647, %v325
      %vm378 = vcmp.eq.f32.partialorder %v377, 8.507059e+37
      %v379 = vand.u32 %v325, 2147483648
      %v380 = vor.u32 1.1754944e-38, %v379
      %v381 = vsel %vm378, %v380, %v376
      %v382 = vmul.f32 %v366, %v381
      %v383 = vrcp.pop %v326
      %v384 = vmul.f32 %v326, %v383
      %v385 = vsub.f32 1.0, %v384
      %v386 = vmul.f32 %v383, %v385
      %v387 = vadd.f32 %v383, %v386
      %vm388 = vweird.f32 %v326
      %vm389 = vweird.f32 %v383
      %vm390 = vmor %vm388, %vm389
      %v391 = vsel %vm390, %v383, %v387
      %v392 = vand.u32 2147483647, %v326
      %vm393 = vcmp.eq.f32.partialorder %v392, 8.507059e+37
      %v394 = vand.u32 %v326, 2147483648
      %v395 = vor.u32 1.1754944e-38, %v394
      %v396 = vsel %vm393, %v395, %v391
      %v397 = vmul.f32 %v367, %v396
      %v398 = vsub.f32 %v356, %v364
      %v399 = vsub.f32 %v357, %v365
      %v400 = vadd.f32 %v382, %v398
      %v401 = vadd.f32 %v397, %v399
      %v402 = vmul.f32 %v400, 16.0
      %v403 = vmul.f32 %v401, 16.0
      %v404 = vsel %vm104, %v402, 0.0
      %v405 = vsel %vm104, %v403, 0.0
      %v406 = vadd.f32 %v404, %v405
      %407 = vadd.xlane.f32.xlu0 %v406
      %v408 = vpop.xlane.xlu0 %407
      %v409 = vrot.slane %v408, 4
      %v410 = vadd.f32 %v408, %v409
      %v411 = vrot.slane %v410, 2
      %v412 = vadd.f32 %v410, %v411
      %v413 = vrot.slane %v412, 1
      %v414 = vadd.f32 %v412, %v413
      %s415 = vtos %v414
      %s416 = smul.f32 %s415, 0.125
      %v417 = vld [vmem:[#allocation10] sm:$0xf]
      %v418 = vld [vmem:[#allocation9] sm:$0xf]
      %v419 = vld [vmem:[#allocation9 + $0x4] sm:$0xf]
      %v420 = vmax.f32 %v418, 1e-24
      %v421 = vrsqrt.pop %v420
      %v422 = vmul.f32 %v421, %v420
      %v423 = vmul.f32 %v422, %v421
      %v424 = vmul.f32 0.5, %v423
      %v425 = vsub.f32 1.5, %v424
      %v426 = vmul.f32 %v421, %v425
      %vm427 = vweird.f32 %v420
      %vm428 = vweird.f32 %v421
      %vm429 = vmor %vm427, %vm428
      %v430 = vsel %vm429, %v421, %v426
      %v431 = vmax.f32 %v419, 1e-24
      %v432 = vrsqrt.pop %v431
      %v433 = vmul.f32 %v432, %v431
      %v434 = vmul.f32 %v433, %v432
      %v435 = vmul.f32 0.5, %v434
      %v436 = vsub.f32 1.5, %v435
      %v437 = vmul.f32 %v432, %v436
      %vm438 = vweird.f32 %v431
      %vm439 = vweird.f32 %v432
      %vm440 = vmor %vm438, %vm439
      %v441 = vsel %vm440, %v432, %v437
      %vm442 = vcmask 7168
      %v444 = vsel %vm442, %v430, 0
      %v447 = vsel %vm442, %v441, 0
      %449 = vmatpush.xpose.msra.mxu0 0.0
      %450 = vmatpush.xpose.msra.mxu0 0.0
      %451 = vmatpush.xpose.msra.mxu0 0.0
      %452 = vmatpush.xpose.msra.mxu0 0.0
      %453 = vmatpush.xpose.msra.mxu0 0.0
      %454 = vmatpush.xpose.msra.mxu0 0.0
      %455 = vmatpush.xpose.msra.mxu0 0.0
      %456 = vmatpush.xpose.msra.mxu0 0.0
      %457 = vmatpush.xpose.msra.mxu0 0.0
      %458 = vmatpush.xpose.msra.mxu0 0.0
      %459 = vmatpush.xpose.msra.mxu0 0.0
      %460 = vmatpush.xpose.msra.mxu0 0.0
      %461 = vmatpush.xpose.msra.mxu0 0.0
      %462 = vmatpush.xpose.msra.mxu0 0.0
      %463 = vmatpush.xpose.msra.mxu0 0.0
      %464 = vmatpush.xpose.msra.mxu0 %v447
      %465 = vmatmul.f32.gmra.mxu0 %v444
      %v466 = vpop.f32.mrf.mxu0
      %v467 = vadd.f32 0.0, %v466
      %468 = vdwg.mxu0
      %v469 = vmul.f32 %v417, %v467
      %v470 = vmul.f32 %v469, 2.0
      %v471 = vsub.f32 2.0, %v470
      %v472 = vmax.f32 %v471, 0.0
      %v473 = vadd.f32 %v472, 1e-08
      %v474 = vrsqrt.pop %v473
      %v475 = vmul.f32 %v474, %v473
      %v476 = vmul.f32 %v475, %v474
      %v477 = vmul.f32 0.5, %v476
      %v478 = vsub.f32 1.5, %v477
      %v479 = vmul.f32 %v474, %v478
      %v480 = vmul.f32 %v473, %v479
      %vm481 = vcmp.eq.f32.partialorder %v473, inf
      %v482 = vsel %vm481, %v473, %v480
      %vm483 = vcmp.eq.f32.partialorder %v473, 0.0
      %v484 = vand.u32 %v473, 2147483648
      %v485 = vsel %vm483, %v484, %v482
      %v486 = vld [vmem:[#allocation11] sm:$0xf]
      %v487 = vld [vmem:[#allocation8] sm:$0xf]
      %v488 = vld [vmem:[#allocation8 + $0x4] sm:$0xf]
      %v489 = vmax.f32 %v487, 1e-24
      %v490 = vrsqrt.pop %v489
      %v491 = vmul.f32 %v490, %v489
      %v492 = vmul.f32 %v491, %v490
      %v493 = vmul.f32 0.5, %v492
      %v494 = vsub.f32 1.5, %v493
      %v495 = vmul.f32 %v490, %v494
      %vm496 = vweird.f32 %v489
      %vm497 = vweird.f32 %v490
      %vm498 = vmor %vm496, %vm497
      %v499 = vsel %vm498, %v490, %v495
      %v500 = vmax.f32 %v488, 1e-24
      %v501 = vrsqrt.pop %v500
      %v502 = vmul.f32 %v501, %v500
      %v503 = vmul.f32 %v502, %v501
      %v504 = vmul.f32 0.5, %v503
      %v505 = vsub.f32 1.5, %v504
      %v506 = vmul.f32 %v501, %v505
      %vm507 = vweird.f32 %v500
      %vm508 = vweird.f32 %v501
      %vm509 = vmor %vm507, %vm508
      %v510 = vsel %vm509, %v501, %v506
      %v512 = vsel %vm442, %v499, 0
      %v515 = vsel %vm442, %v510, 0
      %517 = vmatpush.xpose.msra.mxu0 0.0
      %518 = vmatpush.xpose.msra.mxu0 0.0
      %519 = vmatpush.xpose.msra.mxu0 0.0
      %520 = vmatpush.xpose.msra.mxu0 0.0
      %521 = vmatpush.xpose.msra.mxu0 0.0
      %522 = vmatpush.xpose.msra.mxu0 0.0
      %523 = vmatpush.xpose.msra.mxu0 0.0
      %524 = vmatpush.xpose.msra.mxu0 0.0
      %525 = vmatpush.xpose.msra.mxu0 0.0
      %526 = vmatpush.xpose.msra.mxu0 0.0
      %527 = vmatpush.xpose.msra.mxu0 0.0
      %528 = vmatpush.xpose.msra.mxu0 0.0
      %529 = vmatpush.xpose.msra.mxu0 0.0
      %530 = vmatpush.xpose.msra.mxu0 0.0
      %531 = vmatpush.xpose.msra.mxu0 0.0
      %532 = vmatpush.xpose.msra.mxu0 %v515
      %533 = vmatmul.f32.gmra.mxu0 %v512
      %v534 = vpop.f32.mrf.mxu0
      %v535 = vadd.f32 0.0, %v534
      %536 = vdwg.mxu0
      %v537 = vmul.f32 %v486, %v535
      %v538 = vmul.f32 %v537, 2.0
      %v539 = vsub.f32 2.0, %v538
      %v540 = vmax.f32 %v539, 0.0
      %v541 = vadd.f32 %v540, 1e-08
      %v542 = vrsqrt.pop %v541
      %v543 = vmul.f32 %v542, %v541
      %v544 = vmul.f32 %v543, %v542
      %v545 = vmul.f32 0.5, %v544
      %v546 = vsub.f32 1.5, %v545
      %v547 = vmul.f32 %v542, %v546
      %v548 = vmul.f32 %v541, %v547
      %vm549 = vcmp.eq.f32.partialorder %v541, inf
      %v550 = vsel %vm549, %v541, %v548
      %vm551 = vcmp.eq.f32.partialorder %v541, 0.0
      %v552 = vand.u32 %v541, 2147483648
      %v553 = vsel %vm551, %v552, %v550
      %v554 = vsub.f32 0.0, %v469
      %v555 = vmul.f32 %v554, 0.25
      %v556 = vadd.f32 %v555, 1e-08
      %v557 = vsel %vm257, %v556, -inf
      %558 = vmax.xlane.f32.xlu0 %v557
      %v559 = vpop.xlane.xlu0 %558
      %v560 = vsel %vm61, %v559, -inf
      %v561 = vrot.slane %v560, 4
      %v562 = vmax.f32 %v560, %v561
      %v563 = vrot.slane %v562, 2
      %v564 = vmax.f32 %v562, %v563
      %v565 = vrot.slane %v564, 1
      %v566 = vmax.f32 %v564, %v565
      %v567 = vsub.f32 %v556, %v566
      %v568 = vmul.f32 %v567, 1.442695
      %v569 = vpow.pop %v568
      %v570 = vsel %vm257, %v569, 0.0
      %571 = vadd.xlane.f32.xlu0 %v570
      %v572 = vpop.xlane.xlu0 %571
      %v573 = vsel %vm61, %v572, 0.0
      %v574 = vrot.slane %v573, 4
      %v575 = vadd.f32 %v573, %v574
      %v576 = vrot.slane %v575, 2
      %v577 = vadd.f32 %v575, %v576
      %v578 = vrot.slane %v577, 1
      %v579 = vadd.f32 %v577, %v578
      %v580 = vrcp.pop %v579
      %v581 = vmul.f32 %v579, %v580
      %v582 = vsub.f32 1.0, %v581
      %v583 = vmul.f32 %v580, %v582
      %v584 = vadd.f32 %v580, %v583
      %vm585 = vweird.f32 %v579
      %vm586 = vweird.f32 %v580
      %vm587 = vmor %vm585, %vm586
      %v588 = vsel %vm587, %v580, %v584
      %v589 = vand.u32 2147483647, %v579
      %vm590 = vcmp.eq.f32.partialorder %v589, 8.507059e+37
      %v591 = vand.u32 %v579, 2147483648
      %v592 = vor.u32 1.1754944e-38, %v591
      %v593 = vsel %vm590, %v592, %v588
      %v594 = vmul.f32 16.0, %v593
      %v595 = vmul.f32 %v569, %v594
      %v596 = vsub.f32 %v537, %v469
      %v597 = vmul.f32 %v596, %v596
      %v598 = vmul.f32 %v595, %v597
      %v599 = vmul.f32 %v485, 0.25
      %v600 = vadd.f32 %v599, 1e-08
      %v601 = vsel %vm257, %v600, -inf
      %602 = vmax.xlane.f32.xlu0 %v601
      %v603 = vpop.xlane.xlu0 %602
      %v604 = vsel %vm61, %v603, -inf
      %v605 = vrot.slane %v604, 4
      %v606 = vmax.f32 %v604, %v605
      %v607 = vrot.slane %v606, 2
      %v608 = vmax.f32 %v606, %v607
      %v609 = vrot.slane %v608, 1
      %v610 = vmax.f32 %v608, %v609
      %v611 = vsub.f32 %v600, %v610
      %v612 = vmul.f32 %v611, 1.442695
      %v613 = vpow.pop %v612
      %v614 = vsel %vm257, %v613, 0.0
      %615 = vadd.xlane.f32.xlu0 %v614
      %v616 = vpop.xlane.xlu0 %615
      %v617 = vsel %vm61, %v616, 0.0
      %v618 = vrot.slane %v617, 4
      %v619 = vadd.f32 %v617, %v618
      %v620 = vrot.slane %v619, 2
      %v621 = vadd.f32 %v619, %v620
      %v622 = vrot.slane %v621, 1
      %v623 = vadd.f32 %v621, %v622
      %v624 = vrcp.pop %v623
      %v625 = vmul.f32 %v623, %v624
      %v626 = vsub.f32 1.0, %v625
      %v627 = vmul.f32 %v624, %v626
      %v628 = vadd.f32 %v624, %v627
      %vm629 = vweird.f32 %v623
      %vm630 = vweird.f32 %v624
      %vm631 = vmor %vm629, %vm630
      %v632 = vsel %vm631, %v624, %v628
      %v633 = vand.u32 2147483647, %v623
      %vm634 = vcmp.eq.f32.partialorder %v633, 8.507059e+37
      %v635 = vand.u32 %v623, 2147483648
      %v636 = vor.u32 1.1754944e-38, %v635
      %v637 = vsel %vm634, %v636, %v632
      %v638 = vmul.f32 16.0, %v637
      %v639 = vmul.f32 %v613, %v638
      %v640 = vsub.f32 %v553, %v485
      %v641 = vmul.f32 %v640, %v640
      %v642 = vmul.f32 %v639, %v641
      %v643 = vadd.f32 %v598, %v642
      %v644 = vsel %vm257, %v643, 0.0
      %645 = vadd.xlane.f32.xlu0 %v644
      %v646 = vpop.xlane.xlu0 %645
      %v647 = vrot.slane %v646, 4
      %v648 = vadd.f32 %v646, %v647
      %v649 = vrot.slane %v648, 2
      %v650 = vadd.f32 %v648, %v649
      %v651 = vrot.slane %v650, 1
      %v652 = vadd.f32 %v650, %v651
      %s653 = vtos %v652
      %s654 = smul.f32 %s653, 0.0625
      %s655 = smul.f32 %s416, 0.9
      %s656 = sadd.f32 %s349, %s655
      %s657 = smul.f32 %s654, 0.1
      %s658 = sadd.f32 %s656, %s657
      %s659 = scalar_lea.smem [#allocation15], 0
      %660 = sst [smem:[%s659]] %s658
    $region25: #{tpu_custom_call.1} parent=1 // pred_fallthru
      _
    // Predicated region
    $region26: #{tpu_custom_call.1} parent=1 // pred_check
      _
    $region27: #{tpu_custom_call.1} parent=1 // pred_check_branch
      %662 = sbr.rel (0) target = $region29
    $region28: #{tpu_custom_call.1} parent=1 // pred_region
      %664 = vsyncadd [#allocation14], 0
      %s666 = sshll.u32 %s3, 4
      %s667 = int_to_ptr.hbm [resolvable:$true] %s666
      %669 = dma.smem_to_hbm [#allocation15], 16, %s667, [#allocation14]
    $region29: #{tpu_custom_call.1} parent=1 // pred_fallthru
      _
    // Predicated region
    $region30: #{tpu_custom_call.1} parent=1 // pred_check
      _
    $region31: #{tpu_custom_call.1} parent=1 // pred_check_branch
      %671 = sbr.rel (0) target = $region33
    $region32: #{tpu_custom_call.1} parent=1 // pred_region
      %673 = dma.done [#allocation14], 16
    $region33: #{tpu_custom_call.1} parent=1 // pred_fallthru
      _
    %674 = sfence
    %675 = vsyncpa [#allocation13], 1
    %676 = vsyncpa [#allocation14], 1

</llo_original>
